<compile_context>
chip_gen: v6e
topology: v6e:2x2x1
jax: 0.10.0
libtpu: 0.0.40
codegen_flags: <defaults>
</compile_context>

<pallas_src>
import jax
import jax.numpy as jnp
from jax.experimental import pallas as pl
from jax.experimental.pallas import tpu as pltpu


# ----------------------------------------------------------------------------
# Fused kernel: one tile of Bt images per grid step, everything VMEM-resident.
# ----------------------------------------------------------------------------
def _fused_actor_kernel(p_ref, wc_ref, bc_ref, wfc_ref, bfc_ref, wh_ref, bh_ref,
                        o_ref, y_scr):
    """
    p_ref   : (Bt, 9C, HW)  im2col patches (built in the wrapper), rows = (dh,dw,c_in)
    wc_ref  : (2k, 9C)      fused conv weights (branch1 rows 0:k, branch2 rows k:2k)
    bc_ref  : (2k, 1)
    wfc_ref : (k*HW, L)     FC weight, rows already in PyTorch (C_out, H, W) order
    bfc_ref : (1, L)
    wh_ref  : (L, A)        actor head
    bh_ref  : (1, A)
    o_ref   : (1, Bt, A)    per-tile log-probs
    y_scr   : (Bt, k, HW)   VMEM scratch: conv-output -> FC-input relayout via memory
    """
    Bt = p_ref.shape[0]
    HW = p_ref.shape[2]
    k2 = wc_ref.shape[0]
    k = k2 // 2

    wc = wc_ref[...]                                   # (2k, 9C)
    bc = bc_ref[...]                                   # (2k, 1)

    # ---- multiplicative conv, transposed orientation: activations are (2k, HW) with
    #      HW on lanes -> relu/sigmoid/mul run lane-dense, and the PyTorch
    #      (C_out, H, W) flatten order is the natural row-major order. ----
    for b in range(Bt):                                # static unroll, Bt is small
        a = jnp.dot(wc, p_ref[b], preferred_element_type=jnp.float32) + bc   # (2k, HW)
        y_scr[b] = jnp.maximum(a[:k, :], 0.0) * jax.nn.sigmoid(a[k:, :])     # (k, HW)

    # ---- flatten: feat[b, c*HW + p] = y[b, c, p].  Per-channel strided loads from
    #      the VMEM scratch give lane-dense (Bt, HW) slabs, concatenated at
    #      HW-aligned lane offsets (HW is a multiple of 128). ----
    feat = jnp.concatenate([y_scr[:, c, :] for c in range(k)], axis=-1)      # (Bt, k*HW)

    # ---- FC -> ReLU -> actor head -> log_softmax(dim=1), all with M = Bt ----
    h = jnp.dot(feat, wfc_ref[...], preferred_element_type=jnp.float32) + bfc_ref[...]
    h = jnp.maximum(h, 0.0)                                                   # (Bt, L)
    logits = jnp.dot(h, wh_ref[...], preferred_element_type=jnp.float32) + bh_ref[...]
    m = jnp.max(logits, axis=-1, keepdims=True)        # stable log_softmax
    s = logits - m
    o_ref[0] = s - jnp.log(jnp.sum(jnp.exp(s), axis=-1, keepdims=True))       # (Bt, A)


# ----------------------------------------------------------------------------
# Wrapper: im2col layout plumbing (cheap) + one pallas_call over batch tiles.
# ----------------------------------------------------------------------------
def _pick_block_batch(B):
    """Largest tile <= 8 that divides B while keeping >= 2 grid steps (v7x megacore)."""
    cands = [bt for bt in range(1, 9) if B % bt == 0 and B // bt >= 2]
    return max(cands) if cands else 1


def multiplicative_actor_forward(state_nchw, params):
    """state_nchw: (B, C, H, W) float32 (PyTorch layout) -> (B, action_space) log-probs."""
    B, C, H, W = state_nchw.shape
    wc, bc = params["conv_w"], params["conv_b"]        # (2k, 9C), (2k, 1)
    wfc, bfc = params["fc_w"], params["fc_b"]          # (k*H*W, L), (1, L)
    wh, bh = params["head_w"], params["head_b"]        # (L, A), (1, A)
    k2 = wc.shape[0]
    k_out = k2 // 2
    HW = H * W
    F = wfc.shape[0]
    L, A = wh.shape
    assert F == k_out * HW
    assert HW % 128 == 0, "lane-aligned flatten assumes H*W is a multiple of 128"

    Bt = _pick_block_batch(B)
    nsteps = B // Bt

    # ---- im2col in the wrapper (pure layout plumbing; ~9x of an ~8 KB input). ----
    x = state_nchw.astype(jnp.float32)
    xpad = jnp.pad(x, ((0, 0), (0, 0), (1, 1), (1, 1)))           # (B, C, H+2, W+2)
    taps = [xpad[:, :, dh:dh + H, dw:dw + W] for dh in range(3) for dw in range(3)]
    patches = jnp.stack(taps, axis=1).reshape(B, 9 * C, HW)       # (B, 9C, HW)

    flops = 2 * B * (HW * 9 * C * k2 + F * L + L * A)
    transcendentals = B * (2 * HW * k_out + 2 * A)
    bytes_accessed = 4 * (patches.size + wc.size + bc.size + wfc.size + bfc.size
                          + wh.size + bh.size + B * A)

    grid_spec = pltpu.PrefetchScalarGridSpec(
        num_scalar_prefetch=0,
        grid=(nsteps,),
        in_specs=[
            pl.BlockSpec((Bt, 9 * C, HW), lambda i: (i, 0, 0)),    # per-tile patches
            pl.BlockSpec(wc.shape, lambda i: (0, 0)),              # constant index maps:
            pl.BlockSpec(bc.shape, lambda i: (0, 0)),              # weights stay
            pl.BlockSpec(wfc.shape, lambda i: (0, 0)),             # VMEM-resident
            pl.BlockSpec(bfc.shape, lambda i: (0, 0)),             # across grid steps
            pl.BlockSpec(wh.shape, lambda i: (0, 0)),
            pl.BlockSpec(bh.shape, lambda i: (0, 0)),
        ],
        out_specs=pl.BlockSpec((1, Bt, A), lambda i: (i, 0, 0)),
        scratch_shapes=[pltpu.VMEM((Bt, k_out, HW), jnp.float32)],
    )
    out = pl.pallas_call(
        _fused_actor_kernel,
        out_shape=jax.ShapeDtypeStruct((nsteps, Bt, A), jnp.float32),
        grid_spec=grid_spec,
        compiler_params=pltpu.CompilerParams(
            dimension_semantics=("parallel",),        # shard batch tiles over TCs (v7x)
            vmem_limit_bytes=32 * 1024 * 1024),       # explicit: >v5e's 16 MiB default,
                                                      # well under v7x's 64 MiB physical
        cost_estimate=pl.CostEstimate(flops=flops,
                                      transcendentals=transcendentals,
                                      bytes_accessed=bytes_accessed),
    )(patches, wc, bc, wfc, bfc, wh, bh)
    return out.reshape(B, A)


# ----------------------------------------------------------------------------
# PyTorch-layout parameters + packing into kernel layout (done once at init).
# ----------------------------------------------------------------------------
def init_torch_like_params(key, in_channels, k_out, H, W, linear_size, action_space):
    ks = jax.random.split(key, 8)
    C9 = in_channels * 9
    F = k_out * H * W

    def u(k, shape, fan_in):
        bound = 1.0 / jnp.sqrt(jnp.float32(fan_in))
        return jax.random.uniform(k, shape, jnp.float32, -bound, bound)

    return dict(
        conv1_w=u(ks[0], (k_out, in_channels, 3, 3), C9),   # PyTorch Conv2d layout
        conv1_b=u(ks[1], (k_out,), C9),
        conv2_w=u(ks[2], (k_out, in_channels, 3, 3), C9),
        conv2_b=u(ks[3], (k_out,), C9),
        fc_w=u(ks[4], (linear_size, F), F),                 # PyTorch Linear (out, in)
        fc_b=u(ks[5], (linear_size,), F),
        head_w=u(ks[6], (action_space, linear_size), linear_size),
        head_b=u(ks[7], (action_space,), linear_size),
    )


def pack_params_for_kernel(p):
    def conv_rows(w):   # (k, C, 3, 3) -> (k, 9C); column order (dh, dw, c_in) = taps
        k_out, C, _, _ = w.shape
        return jnp.transpose(w, (0, 2, 3, 1)).reshape(k_out, 9 * C)

    wc = jnp.concatenate([conv_rows(p["conv1_w"]), conv_rows(p["conv2_w"])], axis=0)
    bc = jnp.concatenate([p["conv1_b"], p["conv2_b"]])[:, None]          # (2k, 1)
    # Kernel emits features already in PyTorch (C_out, H, W) flatten order, so the FC
    # weight needs no row permutation -- only the usual (out,in) -> (in,out) transpose.
    return dict(
        conv_w=wc, conv_b=bc,
        fc_w=p["fc_w"].T, fc_b=p["fc_b"][None, :],
        head_w=p["head_w"].T, head_b=p["head_b"][None, :],
    )


# ----------------------------------------------------------------------------
# Independent plain-JAX reference of the same stand-in architecture.
# ----------------------------------------------------------------------------
def reference_forward(state_nchw, tp):
    hi = jax.lax.Precision.HIGHEST
    dn = ("NCHW", "OIHW", "NCHW")
    x = state_nchw.astype(jnp.float32)
    a = jax.lax.conv_general_dilated(x, tp["conv1_w"], (1, 1), "SAME",
                                     dimension_numbers=dn, precision=hi)
    a = a + tp["conv1_b"][None, :, None, None]
    g = jax.lax.conv_general_dilated(x, tp["conv2_w"], (1, 1), "SAME",
                                     dimension_numbers=dn, precision=hi)
    g = g + tp["conv2_b"][None, :, None, None]
    y = jnp.maximum(a, 0.0) * jax.nn.sigmoid(g)                 # (B, k, H, W)
    feat = y.reshape(y.shape[0], -1)                            # PyTorch flatten
    h = jnp.maximum(jnp.dot(feat, tp["fc_w"].T, precision=hi) + tp["fc_b"], 0.0)
    logits = jnp.dot(h, tp["head_w"].T, precision=hi) + tp["head_b"]
    return jax.nn.log_softmax(logits, axis=1)


if __name__ == "__main__":
    B, C, H, W = 8, 4, 16, 16
    k_out, linear_size, action_space = 8, 32, 6

    key = jax.random.PRNGKey(0)
    k_state, k_params = jax.random.split(key)
    state = jax.random.normal(k_state, (B, C, H, W), jnp.float32)   # NCHW, like PyTorch
    tparams = init_torch_like_params(k_params, C, k_out, H, W, linear_size, action_space)
    kparams = pack_params_for_kernel(tparams)

    log_probs = jax.jit(multiplicative_actor_forward)(state, kparams)
    log_probs = jax.block_until_ready(log_probs)

    assert log_probs.shape == (B, action_space)
    # rows of log_softmax exponentiate to ~1
    assert jnp.allclose(jnp.sum(jnp.exp(log_probs), axis=1), 1.0, atol=1e-4)
    # matches the independent plain-JAX reference
    ref = reference_forward(state, tparams)
    assert jnp.allclose(log_probs, ref, atol=5e-4, rtol=5e-4), (log_probs, ref)
    print("KERNEL_OK")
</pallas_src>

<mosaic_0001>
module attributes {stable_mosaic.version = 11 : i64} {
  func.func @_fused_actor_kernel(%arg0: i32, %arg1: memref<4x36x256xf32, #tpu.memory_space<vmem>>, %arg2: memref<16x36xf32, #tpu.memory_space<vmem>>, %arg3: memref<16x1xf32, #tpu.memory_space<vmem>>, %arg4: memref<2048x32xf32, #tpu.memory_space<vmem>>, %arg5: memref<1x32xf32, #tpu.memory_space<vmem>>, %arg6: memref<32x6xf32, #tpu.memory_space<vmem>>, %arg7: memref<1x6xf32, #tpu.memory_space<vmem>>, %arg8: memref<1x4x6xf32, #tpu.memory_space<vmem>>, %arg9: memref<4x8x256xf32, #tpu.memory_space<vmem>>) attributes {dimension_semantics = [#tpu.dimension_semantics<parallel>], iteration_bounds = array<i64: 2>, scalar_prefetch = 0 : i64, scratch_operands = 1 : i64, tpu.core_type = #tpu.core_type<tc>, window_params = [{transform_indices = @transform_0, window_bounds = array<i64: 4, 36, 256>}, {pipeline_mode = #tpu.pipeline_mode<synchronous>, transform_indices = @transform_1, window_bounds = array<i64: 16, 36>}, {pipeline_mode = #tpu.pipeline_mode<synchronous>, transform_indices = @transform_2, window_bounds = array<i64: 16, 1>}, {pipeline_mode = #tpu.pipeline_mode<synchronous>, transform_indices = @transform_3, window_bounds = array<i64: 2048, 32>}, {pipeline_mode = #tpu.pipeline_mode<synchronous>, transform_indices = @transform_4, window_bounds = array<i64: 1, 32>}, {pipeline_mode = #tpu.pipeline_mode<synchronous>, transform_indices = @transform_5, window_bounds = array<i64: 32, 6>}, {pipeline_mode = #tpu.pipeline_mode<synchronous>, transform_indices = @transform_6, window_bounds = array<i64: 1, 6>}, {transform_indices = @transform_7, window_bounds = array<i64: 1, 4, 6>}]} {
    %c0 = arith.constant 0 : index
    %c0_0 = arith.constant 0 : index
    %0 = vector.load %arg2[%c0, %c0_0] : memref<16x36xf32, #tpu.memory_space<vmem>>, vector<16x36xf32>
    %c0_1 = arith.constant 0 : index
    %c0_2 = arith.constant 0 : index
    %1 = vector.load %arg3[%c0_1, %c0_2] : memref<16x1xf32, #tpu.memory_space<vmem>>, vector<16x1xf32>
    %c0_3 = arith.constant 0 : index
    %c0_4 = arith.constant 0 : index
    %c0_5 = arith.constant 0 : index
    %2 = vector.load %arg1[%c0_3, %c0_4, %c0_5] : memref<4x36x256xf32, #tpu.memory_space<vmem>>, vector<1x36x256xf32>
    %3 = vector.shape_cast %2 : vector<1x36x256xf32> to vector<36x256xf32>
    %cst = arith.constant dense<0.000000e+00> : vector<16x256xf32>
    %4 = tpu.matmul %0, %3, %cst {dimension_numbers = #tpu.dot_dimension_numbers<[1], [0], [0], [1], [0, 0, 1, 1], [], []>} : vector<16x36xf32>, vector<36x256xf32>, vector<16x256xf32> -> vector<16x256xf32>
    %5 = vector.broadcast %1 : vector<16x1xf32> to vector<16x256xf32>
    %6 = arith.addf %4, %5 : vector<16x256xf32>
    %7 = vector.extract_strided_slice %6 {offsets = [0, 0], sizes = [8, 256], strides = [1, 1]} : vector<16x256xf32> to vector<8x256xf32>
    %cst_6 = arith.constant 0.000000e+00 : f32
    %8 = vector.broadcast %cst_6 : f32 to vector<8x256xf32>
    %9 = arith.maximumf %7, %8 : vector<8x256xf32>
    %10 = vector.extract_strided_slice %6 {offsets = [8, 0], sizes = [8, 256], strides = [1, 1]} : vector<16x256xf32> to vector<8x256xf32>
    %11 = arith.negf %10 : vector<8x256xf32>
    %12 = math.exp %11 : vector<8x256xf32>
    %cst_7 = arith.constant 1.000000e+00 : f32
    %13 = vector.broadcast %cst_7 : f32 to vector<8x256xf32>
    %14 = arith.addf %13, %12 : vector<8x256xf32>
    %15 = arith.divf %13, %14 : vector<8x256xf32>
    %16 = arith.mulf %9, %15 : vector<8x256xf32>
    %c0_8 = arith.constant 0 : index
    %c0_9 = arith.constant 0 : index
    %c0_10 = arith.constant 0 : index
    %17 = vector.load %arg9[%c0_8, %c0_9, %c0_10] : memref<4x8x256xf32, #tpu.memory_space<vmem>>, vector<1x8x256xf32>
    %18 = vector.shape_cast %17 : vector<1x8x256xf32> to vector<8x256xf32>
    %19 = vector.shape_cast %16 : vector<8x256xf32> to vector<1x8x256xf32>
    tpu.vector_store %arg9[%c0_8, %c0_9, %c0_10], %19 {strides = array<i32>} : memref<4x8x256xf32, #tpu.memory_space<vmem>>, vector<1x8x256xf32>,
    %c1 = arith.constant 1 : index
    %c0_11 = arith.constant 0 : index
    %c0_12 = arith.constant 0 : index
    %20 = vector.load %arg1[%c1, %c0_11, %c0_12] : memref<4x36x256xf32, #tpu.memory_space<vmem>>, vector<1x36x256xf32>
    %21 = vector.shape_cast %20 : vector<1x36x256xf32> to vector<36x256xf32>
    %cst_13 = arith.constant dense<0.000000e+00> : vector<16x256xf32>
    %22 = tpu.matmul %0, %21, %cst_13 {dimension_numbers = #tpu.dot_dimension_numbers<[1], [0], [0], [1], [0, 0, 1, 1], [], []>} : vector<16x36xf32>, vector<36x256xf32>, vector<16x256xf32> -> vector<16x256xf32>
    %23 = vector.broadcast %1 : vector<16x1xf32> to vector<16x256xf32>
    %24 = arith.addf %22, %23 : vector<16x256xf32>
    %25 = vector.extract_strided_slice %24 {offsets = [0, 0], sizes = [8, 256], strides = [1, 1]} : vector<16x256xf32> to vector<8x256xf32>
    %cst_14 = arith.constant 0.000000e+00 : f32
    %26 = vector.broadcast %cst_14 : f32 to vector<8x256xf32>
    %27 = arith.maximumf %25, %26 : vector<8x256xf32>
    %28 = vector.extract_strided_slice %24 {offsets = [8, 0], sizes = [8, 256], strides = [1, 1]} : vector<16x256xf32> to vector<8x256xf32>
    %29 = arith.negf %28 : vector<8x256xf32>
    %30 = math.exp %29 : vector<8x256xf32>
    %cst_15 = arith.constant 1.000000e+00 : f32
    %31 = vector.broadcast %cst_15 : f32 to vector<8x256xf32>
    %32 = arith.addf %31, %30 : vector<8x256xf32>
    %33 = arith.divf %31, %32 : vector<8x256xf32>
    %34 = arith.mulf %27, %33 : vector<8x256xf32>
    %c1_16 = arith.constant 1 : index
    %c0_17 = arith.constant 0 : index
    %c0_18 = arith.constant 0 : index
    %35 = vector.load %arg9[%c1_16, %c0_17, %c0_18] : memref<4x8x256xf32, #tpu.memory_space<vmem>>, vector<1x8x256xf32>
    %36 = vector.shape_cast %35 : vector<1x8x256xf32> to vector<8x256xf32>
    %37 = vector.shape_cast %34 : vector<8x256xf32> to vector<1x8x256xf32>
    tpu.vector_store %arg9[%c1_16, %c0_17, %c0_18], %37 {strides = array<i32>} : memref<4x8x256xf32, #tpu.memory_space<vmem>>, vector<1x8x256xf32>,
    %c2 = arith.constant 2 : index
    %c0_19 = arith.constant 0 : index
    %c0_20 = arith.constant 0 : index
    %38 = vector.load %arg1[%c2, %c0_19, %c0_20] : memref<4x36x256xf32, #tpu.memory_space<vmem>>, vector<1x36x256xf32>
    %39 = vector.shape_cast %38 : vector<1x36x256xf32> to vector<36x256xf32>
    %cst_21 = arith.constant dense<0.000000e+00> : vector<16x256xf32>
    %40 = tpu.matmul %0, %39, %cst_21 {dimension_numbers = #tpu.dot_dimension_numbers<[1], [0], [0], [1], [0, 0, 1, 1], [], []>} : vector<16x36xf32>, vector<36x256xf32>, vector<16x256xf32> -> vector<16x256xf32>
    %41 = vector.broadcast %1 : vector<16x1xf32> to vector<16x256xf32>
    %42 = arith.addf %40, %41 : vector<16x256xf32>
    %43 = vector.extract_strided_slice %42 {offsets = [0, 0], sizes = [8, 256], strides = [1, 1]} : vector<16x256xf32> to vector<8x256xf32>
    %cst_22 = arith.constant 0.000000e+00 : f32
    %44 = vector.broadcast %cst_22 : f32 to vector<8x256xf32>
    %45 = arith.maximumf %43, %44 : vector<8x256xf32>
    %46 = vector.extract_strided_slice %42 {offsets = [8, 0], sizes = [8, 256], strides = [1, 1]} : vector<16x256xf32> to vector<8x256xf32>
    %47 = arith.negf %46 : vector<8x256xf32>
    %48 = math.exp %47 : vector<8x256xf32>
    %cst_23 = arith.constant 1.000000e+00 : f32
    %49 = vector.broadcast %cst_23 : f32 to vector<8x256xf32>
    %50 = arith.addf %49, %48 : vector<8x256xf32>
    %51 = arith.divf %49, %50 : vector<8x256xf32>
    %52 = arith.mulf %45, %51 : vector<8x256xf32>
    %c2_24 = arith.constant 2 : index
    %c0_25 = arith.constant 0 : index
    %c0_26 = arith.constant 0 : index
    %53 = vector.load %arg9[%c2_24, %c0_25, %c0_26] : memref<4x8x256xf32, #tpu.memory_space<vmem>>, vector<1x8x256xf32>
    %54 = vector.shape_cast %53 : vector<1x8x256xf32> to vector<8x256xf32>
    %55 = vector.shape_cast %52 : vector<8x256xf32> to vector<1x8x256xf32>
    tpu.vector_store %arg9[%c2_24, %c0_25, %c0_26], %55 {strides = array<i32>} : memref<4x8x256xf32, #tpu.memory_space<vmem>>, vector<1x8x256xf32>,
    %c3 = arith.constant 3 : index
    %c0_27 = arith.constant 0 : index
    %c0_28 = arith.constant 0 : index
    %56 = vector.load %arg1[%c3, %c0_27, %c0_28] : memref<4x36x256xf32, #tpu.memory_space<vmem>>, vector<1x36x256xf32>
    %57 = vector.shape_cast %56 : vector<1x36x256xf32> to vector<36x256xf32>
    %cst_29 = arith.constant dense<0.000000e+00> : vector<16x256xf32>
    %58 = tpu.matmul %0, %57, %cst_29 {dimension_numbers = #tpu.dot_dimension_numbers<[1], [0], [0], [1], [0, 0, 1, 1], [], []>} : vector<16x36xf32>, vector<36x256xf32>, vector<16x256xf32> -> vector<16x256xf32>
    %59 = vector.broadcast %1 : vector<16x1xf32> to vector<16x256xf32>
    %60 = arith.addf %58, %59 : vector<16x256xf32>
    %61 = vector.extract_strided_slice %60 {offsets = [0, 0], sizes = [8, 256], strides = [1, 1]} : vector<16x256xf32> to vector<8x256xf32>
    %cst_30 = arith.constant 0.000000e+00 : f32
    %62 = vector.broadcast %cst_30 : f32 to vector<8x256xf32>
    %63 = arith.maximumf %61, %62 : vector<8x256xf32>
    %64 = vector.extract_strided_slice %60 {offsets = [8, 0], sizes = [8, 256], strides = [1, 1]} : vector<16x256xf32> to vector<8x256xf32>
    %65 = arith.negf %64 : vector<8x256xf32>
    %66 = math.exp %65 : vector<8x256xf32>
    %cst_31 = arith.constant 1.000000e+00 : f32
    %67 = vector.broadcast %cst_31 : f32 to vector<8x256xf32>
    %68 = arith.addf %67, %66 : vector<8x256xf32>
    %69 = arith.divf %67, %68 : vector<8x256xf32>
    %70 = arith.mulf %63, %69 : vector<8x256xf32>
    %c3_32 = arith.constant 3 : index
    %c0_33 = arith.constant 0 : index
    %c0_34 = arith.constant 0 : index
    %71 = vector.load %arg9[%c3_32, %c0_33, %c0_34] : memref<4x8x256xf32, #tpu.memory_space<vmem>>, vector<1x8x256xf32>
    %72 = vector.shape_cast %71 : vector<1x8x256xf32> to vector<8x256xf32>
    %73 = vector.shape_cast %70 : vector<8x256xf32> to vector<1x8x256xf32>
    tpu.vector_store %arg9[%c3_32, %c0_33, %c0_34], %73 {strides = array<i32>} : memref<4x8x256xf32, #tpu.memory_space<vmem>>, vector<1x8x256xf32>,
    %c0_35 = arith.constant 0 : index
    %c0_36 = arith.constant 0 : index
    %c0_37 = arith.constant 0 : index
    %74 = vector.load %arg9[%c0_35, %c0_36, %c0_37] : memref<4x8x256xf32, #tpu.memory_space<vmem>>, vector<4x1x256xf32>
    %75 = vector.shape_cast %74 : vector<4x1x256xf32> to vector<4x256xf32>
    %c0_38 = arith.constant 0 : index
    %c1_39 = arith.constant 1 : index
    %c0_40 = arith.constant 0 : index
    %76 = vector.load %arg9[%c0_38, %c1_39, %c0_40] : memref<4x8x256xf32, #tpu.memory_space<vmem>>, vector<4x1x256xf32>
    %77 = vector.shape_cast %76 : vector<4x1x256xf32> to vector<4x256xf32>
    %c0_41 = arith.constant 0 : index
    %c2_42 = arith.constant 2 : index
    %c0_43 = arith.constant 0 : index
    %78 = vector.load %arg9[%c0_41, %c2_42, %c0_43] : memref<4x8x256xf32, #tpu.memory_space<vmem>>, vector<4x1x256xf32>
    %79 = vector.shape_cast %78 : vector<4x1x256xf32> to vector<4x256xf32>
    %c0_44 = arith.constant 0 : index
    %c3_45 = arith.constant 3 : index
    %c0_46 = arith.constant 0 : index
    %80 = vector.load %arg9[%c0_44, %c3_45, %c0_46] : memref<4x8x256xf32, #tpu.memory_space<vmem>>, vector<4x1x256xf32>
    %81 = vector.shape_cast %80 : vector<4x1x256xf32> to vector<4x256xf32>
    %c0_47 = arith.constant 0 : index
    %c4 = arith.constant 4 : index
    %c0_48 = arith.constant 0 : index
    %82 = vector.load %arg9[%c0_47, %c4, %c0_48] : memref<4x8x256xf32, #tpu.memory_space<vmem>>, vector<4x1x256xf32>
    %83 = vector.shape_cast %82 : vector<4x1x256xf32> to vector<4x256xf32>
    %c0_49 = arith.constant 0 : index
    %c5 = arith.constant 5 : index
    %c0_50 = arith.constant 0 : index
    %84 = vector.load %arg9[%c0_49, %c5, %c0_50] : memref<4x8x256xf32, #tpu.memory_space<vmem>>, vector<4x1x256xf32>
    %85 = vector.shape_cast %84 : vector<4x1x256xf32> to vector<4x256xf32>
    %c0_51 = arith.constant 0 : index
    %c6 = arith.constant 6 : index
    %c0_52 = arith.constant 0 : index
    %86 = vector.load %arg9[%c0_51, %c6, %c0_52] : memref<4x8x256xf32, #tpu.memory_space<vmem>>, vector<4x1x256xf32>
    %87 = vector.shape_cast %86 : vector<4x1x256xf32> to vector<4x256xf32>
    %c0_53 = arith.constant 0 : index
    %c7 = arith.constant 7 : index
    %c0_54 = arith.constant 0 : index
    %88 = vector.load %arg9[%c0_53, %c7, %c0_54] : memref<4x8x256xf32, #tpu.memory_space<vmem>>, vector<4x1x256xf32>
    %89 = vector.shape_cast %88 : vector<4x1x256xf32> to vector<4x256xf32>
    %90 = tpu.concatenate %75, %77, %79, %81, %83, %85, %87, %89 in 1 : vector<4x256xf32>, vector<4x256xf32>, vector<4x256xf32>, vector<4x256xf32>, vector<4x256xf32>, vector<4x256xf32>, vector<4x256xf32>, vector<4x256xf32> -> vector<4x2048xf32>
    %c0_55 = arith.constant 0 : index
    %c0_56 = arith.constant 0 : index
    %91 = vector.load %arg4[%c0_55, %c0_56] : memref<2048x32xf32, #tpu.memory_space<vmem>>, vector<2048x32xf32>
    %cst_57 = arith.constant dense<0.000000e+00> : vector<4x32xf32>
    %92 = tpu.matmul %90, %91, %cst_57 {dimension_numbers = #tpu.dot_dimension_numbers<[1], [0], [0], [1], [0, 0, 1, 1], [], []>} : vector<4x2048xf32>, vector<2048x32xf32>, vector<4x32xf32> -> vector<4x32xf32>
    %c0_58 = arith.constant 0 : index
    %c0_59 = arith.constant 0 : index
    %93 = vector.load %arg5[%c0_58, %c0_59] : memref<1x32xf32, #tpu.memory_space<vmem>>, vector<1x32xf32>
    %94 = vector.broadcast %93 : vector<1x32xf32> to vector<4x32xf32>
    %95 = arith.addf %92, %94 : vector<4x32xf32>
    %cst_60 = arith.constant 0.000000e+00 : f32
    %96 = vector.broadcast %cst_60 : f32 to vector<4x32xf32>
    %97 = arith.maximumf %95, %96 : vector<4x32xf32>
    %c0_61 = arith.constant 0 : index
    %c0_62 = arith.constant 0 : index
    %98 = vector.load %arg6[%c0_61, %c0_62] : memref<32x6xf32, #tpu.memory_space<vmem>>, vector<32x6xf32>
    %cst_63 = arith.constant dense<0.000000e+00> : vector<4x6xf32>
    %99 = tpu.matmul %97, %98, %cst_63 {dimension_numbers = #tpu.dot_dimension_numbers<[1], [0], [0], [1], [0, 0, 1, 1], [], []>} : vector<4x32xf32>, vector<32x6xf32>, vector<4x6xf32> -> vector<4x6xf32>
    %c0_64 = arith.constant 0 : index
    %c0_65 = arith.constant 0 : index
    %100 = vector.load %arg7[%c0_64, %c0_65] : memref<1x6xf32, #tpu.memory_space<vmem>>, vector<1x6xf32>
    %101 = vector.broadcast %100 : vector<1x6xf32> to vector<4x6xf32>
    %102 = arith.addf %99, %101 : vector<4x6xf32>
    %cst_66 = arith.constant dense<0xFF800000> : vector<4xf32>
    %103 = vector.multi_reduction <maximumf>, %102, %cst_66 [1] : vector<4x6xf32> to vector<4xf32>
    %104 = vector.shape_cast %103 : vector<4xf32> to vector<4x1xf32>
    %105 = vector.broadcast %104 : vector<4x1xf32> to vector<4x6xf32>
    %106 = arith.subf %102, %105 : vector<4x6xf32>
    %107 = math.exp %106 : vector<4x6xf32>
    %cst_67 = arith.constant dense<0.000000e+00> : vector<4xf32>
    %108 = vector.multi_reduction <add>, %107, %cst_67 [1] : vector<4x6xf32> to vector<4xf32>
    %109 = vector.shape_cast %108 : vector<4xf32> to vector<4x1xf32>
    %110 = math.log %109 : vector<4x1xf32>
    %111 = vector.broadcast %110 : vector<4x1xf32> to vector<4x6xf32>
    %112 = arith.subf %106, %111 : vector<4x6xf32>
    %c0_68 = arith.constant 0 : index
    %c0_69 = arith.constant 0 : index
    %c0_70 = arith.constant 0 : index
    %113 = vector.load %arg8[%c0_68, %c0_69, %c0_70] : memref<1x4x6xf32, #tpu.memory_space<vmem>>, vector<1x4x6xf32>
    %114 = vector.shape_cast %113 : vector<1x4x6xf32> to vector<4x6xf32>
    %115 = vector.shape_cast %112 : vector<4x6xf32> to vector<1x4x6xf32>
    tpu.vector_store %arg8[%c0_68, %c0_69, %c0_70], %115 {strides = array<i32>} : memref<1x4x6xf32, #tpu.memory_space<vmem>>, vector<1x4x6xf32>,
    return
  }
  func.func @transform_0(%arg0: i32) -> (i32, i32, i32) {
    %c0_i32 = arith.constant 0 : i32
    %c0_i32_0 = arith.constant 0 : i32
    %c0_i32_1 = arith.constant 0 : i32
    return %arg0, %c0_i32, %c0_i32_0 : i32, i32, i32
  }
  func.func @transform_1(%arg0: i32) -> (i32, i32) {
    %c0_i32 = arith.constant 0 : i32
    %c0_i32_0 = arith.constant 0 : i32
    %c0_i32_1 = arith.constant 0 : i32
    return %c0_i32, %c0_i32_0 : i32, i32
  }
  func.func @transform_2(%arg0: i32) -> (i32, i32) {
    %c0_i32 = arith.constant 0 : i32
    %c0_i32_0 = arith.constant 0 : i32
    %c0_i32_1 = arith.constant 0 : i32
    return %c0_i32, %c0_i32_0 : i32, i32
  }
  func.func @transform_3(%arg0: i32) -> (i32, i32) {
    %c0_i32 = arith.constant 0 : i32
    %c0_i32_0 = arith.constant 0 : i32
    %c0_i32_1 = arith.constant 0 : i32
    return %c0_i32, %c0_i32_0 : i32, i32
  }
  func.func @transform_4(%arg0: i32) -> (i32, i32) {
    %c0_i32 = arith.constant 0 : i32
    %c0_i32_0 = arith.constant 0 : i32
    %c0_i32_1 = arith.constant 0 : i32
    return %c0_i32, %c0_i32_0 : i32, i32
  }
  func.func @transform_5(%arg0: i32) -> (i32, i32) {
    %c0_i32 = arith.constant 0 : i32
    %c0_i32_0 = arith.constant 0 : i32
    %c0_i32_1 = arith.constant 0 : i32
    return %c0_i32, %c0_i32_0 : i32, i32
  }
  func.func @transform_6(%arg0: i32) -> (i32, i32) {
    %c0_i32 = arith.constant 0 : i32
    %c0_i32_0 = arith.constant 0 : i32
    %c0_i32_1 = arith.constant 0 : i32
    return %c0_i32, %c0_i32_0 : i32, i32
  }
  func.func @transform_7(%arg0: i32) -> (i32, i32, i32) {
    %c0_i32 = arith.constant 0 : i32
    %c0_i32_0 = arith.constant 0 : i32
    %c0_i32_1 = arith.constant 0 : i32
    return %arg0, %c0_i32, %c0_i32_0 : i32, i32, i32
  }
}

</mosaic_0001>

<llo_original>
// kernel: multiplicative_actor_forward.1
$region0: #{multiplicative_actor_forward.1}
  #allocation0 [shape = 'u32[]', space=smem, size = 0x4, offset = 0x4, fixed_abs, tag = 'smem constant byte address 0x4 - core index']
  #allocation1 [shape = 'u32[144,128]{1,0:T(1,128)}', space=vmem, size = 0x12000, scoped, tag = 'internal scratch']
  #allocation2 [shape = 'f32[4,8,256]{2,1,0:T(8,128)}', space=vmem, size = 0x8000, scoped, tag = 'scratch operand']
  %s0 = inlined_call_operand.vmem [shape: f32[8,36,256], index: 0, kind: input, shape index: {}]
  %s1 = inlined_call_operand.vmem [shape: f32[16,36], index: 1, kind: input, shape index: {}]
  %s2 = inlined_call_operand.vmem [shape: f32[16,1], index: 2, kind: input, shape index: {}]
  %s3 = inlined_call_operand.vmem [shape: f32[2048,32], index: 3, kind: input, shape index: {}]
  %s4 = inlined_call_operand.vmem [shape: f32[1,32], index: 4, kind: input, shape index: {}]
  %s5 = inlined_call_operand.vmem [shape: f32[32,6], index: 5, kind: input, shape index: {}]
  %s6 = inlined_call_operand.vmem [shape: f32[1,6], index: 6, kind: input, shape index: {}]
  %s7 = inlined_call_operand.hbm [shape: f32[2,4,6], index: 7, kind: output, shape index: {}]
  %s8 = sld [smem:[#allocation0]]
  $region61: #{multiplicative_actor_forward.1} parent=0
    _
  %s10 = ssub.s32 1, %s8
  %s11 = scalar_select 0, %s10, %s8
  $region1: #{multiplicative_actor_forward.1} parent=0
    #allocation3 [shape = 'u8[4096]{0}', space=vmem, size = 0x1000, scoped, tag = 'output window, operand 0']
    #allocation4 [shape = 's32[2]{0}', space=sflag, size = 0x8, scoped, tag = 'scoped memory for multiplicative_actor_forward.1']
    %12 = vsyncpa [#allocation4], 0
    %s13 = scalar_lea.sflag [#allocation4], 1
    %14 = vsyncpa %s13, 0
    loop: start=0, step=1, limit=4
    $region2: #{multiplicative_actor_forward.1} parent=1 // loop_pre_header
      _
    $region3: #{multiplicative_actor_forward.1} parent=1 // loop_header
      %s16 = sphi 0, %s20
      %p17 = scmp.ge.s32.totalorder %s16, 4
      %s26 = sphi 0, %s28
      %s29 = sphi 0, %s26
      %s30 = sphi 0, %s29
      %s46 = sphi 0, %s30
      %s50 = sphi 0, %s50
      %s52 = sphi 0, %s50
      %s53 = sphi 0, %s52
      %s67 = sphi 0, %s53
      %s71 = sphi 0, %s71
      %s73 = sphi 0, %s71
      %s74 = sphi 0, %s73
      %s88 = sphi 0, %s74
      %s92 = sphi 0, %s92
      %s94 = sphi 0, %s92
      %s95 = sphi 0, %s94
      %s109 = sphi 0, %s95
      %s113 = sphi 0, %s113
      %s115 = sphi 0, %s113
      %s116 = sphi 0, %s115
      %s130 = sphi 0, %s116
      %s134 = sphi 0, %s134
      %s136 = sphi 0, %s134
      %s137 = sphi 0, %s136
      %s151 = sphi 0, %s137
      %s155 = sphi 0, %s155
      %s157 = sphi 0, %s155
      %s158 = sphi 0, %s157
      %s172 = sphi 0, %s158
      %s178 = sphi 0, %s180
      %s181 = sphi 0, %s178
      %s182 = sphi 0, %s181
      %s198 = sphi 0, %s182
    $region4: #{multiplicative_actor_forward.1} parent=1 // loop_header_branch
      %19 = sbr.rel (%p17) target = $region8
    $region5: #{multiplicative_actor_forward.1} parent=1 // loop_body
      %s21 = ssub.s32 %s16, 1
      %s22 = ssub.s32 %s16, 2
      %s23 = sadd.s32 %s16, 1
      %s24 = ssub.s32 %s16, %s23
      %p25 = scmp.eq.s32.totalorder %s24, 0
      %s27 = sadd.s32 %s26, 1
      %s28 = scalar_select %p25, %s26, %s27
      %p31 = pneg %p25
      %p32 = scmp.eq.s32.totalorder %s16, 1
      %p33 = por %p31, %p32
      %p34 = scmp.ne.s32.totalorder %s26, %s29
      %p35 = scmp.eq.s32.totalorder %s16, 0
      %p36 = por %p34, %p35
      %p37 = scmp.ne.s32.totalorder %s26, %s29
      %p38 = scmp.eq.s32.totalorder %s21, 1
      %p39 = por %p37, %p38
      %p40 = scmp.ne.s32.totalorder %s29, %s30
      %p41 = scmp.eq.s32.totalorder %s21, 0
      %p42 = por %p40, %p41
      %p43 = scmp.ne.s32.totalorder %s29, %s30
      %p44 = scmp.eq.s32.totalorder %s22, 1
      %p45 = por %p43, %p44
      %p47 = scmp.ne.s32.totalorder %s30, %s46
      %p48 = scmp.eq.s32.totalorder %s22, 0
      %p49 = por %p47, %p48
      %s51 = sadd.s32 %s50, 1
      %p54 = scmp.eq.s32.totalorder %s16, 1
      %p55 = scmp.ne.s32.totalorder %s50, %s52
      %p56 = scmp.eq.s32.totalorder %s16, 0
      %p57 = por %p55, %p56
      %p58 = scmp.ne.s32.totalorder %s50, %s52
      %p59 = scmp.eq.s32.totalorder %s21, 1
      %p60 = por %p58, %p59
      %p61 = scmp.ne.s32.totalorder %s52, %s53
      %p62 = scmp.eq.s32.totalorder %s21, 0
      %p63 = por %p61, %p62
      %p64 = scmp.ne.s32.totalorder %s52, %s53
      %p65 = scmp.eq.s32.totalorder %s22, 1
      %p66 = por %p64, %p65
      %p68 = scmp.ne.s32.totalorder %s53, %s67
      %p69 = scmp.eq.s32.totalorder %s22, 0
      %p70 = por %p68, %p69
      %s72 = sadd.s32 %s71, 1
      %p75 = scmp.eq.s32.totalorder %s16, 1
      %p76 = scmp.ne.s32.totalorder %s71, %s73
      %p77 = scmp.eq.s32.totalorder %s16, 0
      %p78 = por %p76, %p77
      %p79 = scmp.ne.s32.totalorder %s71, %s73
      %p80 = scmp.eq.s32.totalorder %s21, 1
      %p81 = por %p79, %p80
      %p82 = scmp.ne.s32.totalorder %s73, %s74
      %p83 = scmp.eq.s32.totalorder %s21, 0
      %p84 = por %p82, %p83
      %p85 = scmp.ne.s32.totalorder %s73, %s74
      %p86 = scmp.eq.s32.totalorder %s22, 1
      %p87 = por %p85, %p86
      %p89 = scmp.ne.s32.totalorder %s74, %s88
      %p90 = scmp.eq.s32.totalorder %s22, 0
      %p91 = por %p89, %p90
      %s93 = sadd.s32 %s92, 1
      %p96 = scmp.eq.s32.totalorder %s16, 1
      %p97 = scmp.ne.s32.totalorder %s92, %s94
      %p98 = scmp.eq.s32.totalorder %s16, 0
      %p99 = por %p97, %p98
      %p100 = scmp.ne.s32.totalorder %s92, %s94
      %p101 = scmp.eq.s32.totalorder %s21, 1
      %p102 = por %p100, %p101
      %p103 = scmp.ne.s32.totalorder %s94, %s95
      %p104 = scmp.eq.s32.totalorder %s21, 0
      %p105 = por %p103, %p104
      %p106 = scmp.ne.s32.totalorder %s94, %s95
      %p107 = scmp.eq.s32.totalorder %s22, 1
      %p108 = por %p106, %p107
      %p110 = scmp.ne.s32.totalorder %s95, %s109
      %p111 = scmp.eq.s32.totalorder %s22, 0
      %p112 = por %p110, %p111
      %s114 = sadd.s32 %s113, 1
      %p117 = scmp.eq.s32.totalorder %s16, 1
      %p118 = scmp.ne.s32.totalorder %s113, %s115
      %p119 = scmp.eq.s32.totalorder %s16, 0
      %p120 = por %p118, %p119
      %p121 = scmp.ne.s32.totalorder %s113, %s115
      %p122 = scmp.eq.s32.totalorder %s21, 1
      %p123 = por %p121, %p122
      %p124 = scmp.ne.s32.totalorder %s115, %s116
      %p125 = scmp.eq.s32.totalorder %s21, 0
      %p126 = por %p124, %p125
      %p127 = scmp.ne.s32.totalorder %s115, %s116
      %p128 = scmp.eq.s32.totalorder %s22, 1
      %p129 = por %p127, %p128
      %p131 = scmp.ne.s32.totalorder %s116, %s130
      %p132 = scmp.eq.s32.totalorder %s22, 0
      %p133 = por %p131, %p132
      %s135 = sadd.s32 %s134, 1
      %p138 = scmp.eq.s32.totalorder %s16, 1
      %p139 = scmp.ne.s32.totalorder %s134, %s136
      %p140 = scmp.eq.s32.totalorder %s16, 0
      %p141 = por %p139, %p140
      %p142 = scmp.ne.s32.totalorder %s134, %s136
      %p143 = scmp.eq.s32.totalorder %s21, 1
      %p144 = por %p142, %p143
      %p145 = scmp.ne.s32.totalorder %s136, %s137
      %p146 = scmp.eq.s32.totalorder %s21, 0
      %p147 = por %p145, %p146
      %p148 = scmp.ne.s32.totalorder %s136, %s137
      %p149 = scmp.eq.s32.totalorder %s22, 1
      %p150 = por %p148, %p149
      %p152 = scmp.ne.s32.totalorder %s137, %s151
      %p153 = scmp.eq.s32.totalorder %s22, 0
      %p154 = por %p152, %p153
      %s156 = sadd.s32 %s155, 1
      %p159 = scmp.eq.s32.totalorder %s16, 1
      %p160 = scmp.ne.s32.totalorder %s155, %s157
      %p161 = scmp.eq.s32.totalorder %s16, 0
      %p162 = por %p160, %p161
      %p163 = scmp.ne.s32.totalorder %s155, %s157
      %p164 = scmp.eq.s32.totalorder %s21, 1
      %p165 = por %p163, %p164
      %p166 = scmp.ne.s32.totalorder %s157, %s158
      %p167 = scmp.eq.s32.totalorder %s21, 0
      %p168 = por %p166, %p167
      %p169 = scmp.ne.s32.totalorder %s157, %s158
      %p170 = scmp.eq.s32.totalorder %s22, 1
      %p171 = por %p169, %p170
      %p173 = scmp.ne.s32.totalorder %s158, %s172
      %p174 = scmp.eq.s32.totalorder %s22, 0
      %p175 = por %p173, %p174
      %s176 = ssub.s32 %s16, %s23
      %p177 = scmp.eq.s32.totalorder %s176, 0
      %s179 = sadd.s32 %s178, 1
      %s180 = scalar_select %p177, %s178, %s179
      %p183 = pneg %p177
      %p184 = scmp.eq.s32.totalorder %s16, 1
      %p185 = por %p183, %p184
      %p186 = scmp.ne.s32.totalorder %s178, %s181
      %p187 = scmp.eq.s32.totalorder %s16, 0
      %p188 = por %p186, %p187
      %p189 = scmp.ne.s32.totalorder %s178, %s181
      %p190 = scmp.eq.s32.totalorder %s21, 1
      %p191 = por %p189, %p190
      %p192 = scmp.ne.s32.totalorder %s181, %s182
      %p193 = scmp.eq.s32.totalorder %s21, 0
      %p194 = por %p192, %p193
      %p195 = scmp.ne.s32.totalorder %s181, %s182
      %p196 = scmp.eq.s32.totalorder %s22, 1
      %p197 = por %p195, %p196
      %p199 = scmp.ne.s32.totalorder %s182, %s198
      %p200 = scmp.eq.s32.totalorder %s22, 0
      %p201 = por %p199, %p200
      %p202 = scmp.le.s32.totalorder 1, %s16
      %p203 = scmp.lt.s32.totalorder %s16, 3
      %p204 = pnand %p202, %p203
      %p205 = pneg %p204
      // Predicated region
      $region9: #{multiplicative_actor_forward.1} parent=5 // pred_check
        _
      $region10: #{multiplicative_actor_forward.1} parent=5 // pred_check_branch
        %207 = sbr.rel (%p204) target = $region12
      $region11: #{multiplicative_actor_forward.1} parent=5 // pred_region
        %s208 = ssub.s32 %s16, 1
        // Predicated region
        $region13: #{multiplicative_actor_forward.1} parent=11 // pred_check
          %p209 = pneg %p63
        $region14: #{multiplicative_actor_forward.1} parent=11 // pred_check_branch
          %211 = sbr.rel (%p209) target = $region16
        $region15: #{multiplicative_actor_forward.1} parent=11 // pred_region
          _
        $region16: #{multiplicative_actor_forward.1} parent=11 // pred_fallthru
          _
        // Predicated region
        $region17: #{multiplicative_actor_forward.1} parent=11 // pred_check
          %p212 = pneg %p84
        $region18: #{multiplicative_actor_forward.1} parent=11 // pred_check_branch
          %214 = sbr.rel (%p212) target = $region20
        $region19: #{multiplicative_actor_forward.1} parent=11 // pred_region
          _
        $region20: #{multiplicative_actor_forward.1} parent=11 // pred_fallthru
          _
        // Predicated region
        $region21: #{multiplicative_actor_forward.1} parent=11 // pred_check
          %p215 = pneg %p105
        $region22: #{multiplicative_actor_forward.1} parent=11 // pred_check_branch
          %217 = sbr.rel (%p215) target = $region24
        $region23: #{multiplicative_actor_forward.1} parent=11 // pred_region
          _
        $region24: #{multiplicative_actor_forward.1} parent=11 // pred_fallthru
          _
        // Predicated region
        $region25: #{multiplicative_actor_forward.1} parent=11 // pred_check
          %p218 = pneg %p126
        $region26: #{multiplicative_actor_forward.1} parent=11 // pred_check_branch
          %220 = sbr.rel (%p218) target = $region28
        $region27: #{multiplicative_actor_forward.1} parent=11 // pred_region
          _
        $region28: #{multiplicative_actor_forward.1} parent=11 // pred_fallthru
          _
        // Predicated region
        $region29: #{multiplicative_actor_forward.1} parent=11 // pred_check
          %p221 = pneg %p147
        $region30: #{multiplicative_actor_forward.1} parent=11 // pred_check_branch
          %223 = sbr.rel (%p221) target = $region32
        $region31: #{multiplicative_actor_forward.1} parent=11 // pred_region
          _
        $region32: #{multiplicative_actor_forward.1} parent=11 // pred_fallthru
          _
        // Predicated region
        $region33: #{multiplicative_actor_forward.1} parent=11 // pred_check
          %p224 = pneg %p168
        $region34: #{multiplicative_actor_forward.1} parent=11 // pred_check_branch
          %226 = sbr.rel (%p224) target = $region36
        $region35: #{multiplicative_actor_forward.1} parent=11 // pred_region
          _
        $region36: #{multiplicative_actor_forward.1} parent=11 // pred_fallthru
          _
      $region12: #{multiplicative_actor_forward.1} parent=5 // pred_fallthru
        _
      %p227 = scmp.lt.s32.totalorder %s16, 2
      // Predicated region
      $region37: #{multiplicative_actor_forward.1} parent=5 // pred_check
        %p228 = pneg %p227
      $region38: #{multiplicative_actor_forward.1} parent=5 // pred_check_branch
        %230 = sbr.rel (%p228) target = $region40
      $region39: #{multiplicative_actor_forward.1} parent=5 // pred_region
        // Predicated region
        $region41: #{multiplicative_actor_forward.1} parent=39 // pred_check
          %p231 = pneg %p36
        $region42: #{multiplicative_actor_forward.1} parent=39 // pred_check_branch
          %233 = sbr.rel (%p231) target = $region44
        $region43: #{multiplicative_actor_forward.1} parent=39 // pred_region
          %s234 = smul.u32 4, %s16
          %p235 = scmp.lt.s32.totalorder %s234, 7
          %s236 = scalar_select %p235, %s234, 7
          %s237 = smul.addr %s236, 10
          %s238 = smul.addr %s237, 8
          %s239 = scalar_lea.vmem %s0, %s238
          %s240 = smul.u32 4, %s16
        $region44: #{multiplicative_actor_forward.1} parent=39 // pred_fallthru
          _
      $region40: #{multiplicative_actor_forward.1} parent=5 // pred_fallthru
        _
      %p241 = scmp.le.s32.totalorder 1, %s16
      %p242 = scmp.lt.s32.totalorder %s16, 3
      %p243 = pnand %p241, %p242
      %p244 = pneg %p243
      // Predicated region
      $region45: #{multiplicative_actor_forward.1} parent=5 // pred_check
        _
      $region46: #{multiplicative_actor_forward.1} parent=5 // pred_check_branch
        %246 = sbr.rel (%p243) target = $region48
      $region47: #{multiplicative_actor_forward.1} parent=5 // pred_region
        %s247 = ssub.s32 %s16, 1
        %s248 = smul.u32 4, %s21
        %p249 = scmp.lt.s32.totalorder %s248, 7
        %s250 = scalar_select %p249, %s248, 7
        %s251 = smul.addr %s250, 10
        %s252 = smul.addr %s251, 8
        %s253 = scalar_lea.vmem %s0, %s252
        %p254 = pneg %p42
        %p255 = pneg %p39
        %p256 = pneg %p63
        %p257 = pneg %p60
        %p258 = pneg %p84
        %p259 = pneg %p81
        %p260 = pneg %p105
        %p261 = pneg %p102
        %p262 = pneg %p126
        %p263 = pneg %p123
        %p264 = pneg %p147
        %p265 = pneg %p144
        %p266 = pneg %p168
        %p267 = pneg %p165
        %p268 = pneg %p194
        %p269 = pneg %p191
        %s270 = sand.u32 %s181, 1
        %s271 = scalar_lea.sflag [#allocation4], %s270
        %s272 = sand.u32 %s181, 1
        %s273 = smul.addr %s272, 4
        %s274 = scalar_lea.vmem [#allocation3], %s273
        %s275 = smul.u32 4, %s21
        %p276 = scmp.lt.s32.totalorder %s275, 7
        %s277 = scalar_select %p276, %s275, 7
        %s278 = smul.addr %s277, 10
        %s279 = smul.addr %s278, 8
        %s280 = scalar_lea.vmem %s0, %s279
        %s281 = smul.u32 4, %s21
        %v282 = vld [vmem:[%s1] sm:$0xff]
        %v283 = vld [vmem:[%s1 + $0x8] sm:$0xff]
        %v284 = vld [vmem:[%s2] sm:$0xff]
        %v285 = vld [vmem:[%s2 + $0x8] sm:$0xff]
        %v286 = vld [vmem:[%s280] sm:$0xff]
        %v287 = vld [vmem:[%s280 + $0x8] sm:$0xff]
        %v288 = vld [vmem:[%s280 + $0x10] sm:$0xff]
        %v289 = vld [vmem:[%s280 + $0x18] sm:$0xff]
        %v290 = vld [vmem:[%s280 + $0x20] sm:$0xff]
        %v291 = vld [vmem:[%s280 + $0x28] sm:$0xff]
        %v292 = vld [vmem:[%s280 + $0x30] sm:$0xff]
        %v293 = vld [vmem:[%s280 + $0x38] sm:$0xff]
        %v294 = vld [vmem:[%s280 + $0x40] sm:$0xf]
        %v295 = vld [vmem:[%s280 + $0x48] sm:$0xf]
        %297 = vset.pattern.permute.xlu0 0
        %298 = vperm.xlu0 %297, %v284
        %v299 = vpop.permute.xlu0 %298
        %302 = vset.pattern.permute.xlu0 0
        %303 = vperm.xlu0 %302, %v285
        %v304 = vpop.permute.xlu0 %303
        %vm306 = vcmask 293888
        %v308 = vsel %vm306, %v282, 0
        %v311 = vsel %vm306, %v283, 0
        %vm313 = vcmask 1043456
        %v315 = vsel %vm313, %v294, 0
        %v318 = vsel %vm313, %v295, 0
        %320 = vmatprep.subr.mxu0 0.0
        %321 = vmatpush1.msra.mxu0 0.0
        %322 = vmatprep.subr.mxu0 0.0
        %323 = vmatpush1.msra.mxu0 0.0
        %324 = vmatprep.subr.mxu0 0.0
        %325 = vmatpush1.msra.mxu0 0.0
        %326 = vmatprep.subr.mxu0 0.0
        %327 = vmatpush1.msra.mxu0 0.0
        %328 = vmatprep.subr.mxu0 0.0
        %329 = vmatpush1.msra.mxu0 0.0
        %330 = vmatprep.subr.mxu0 0.0
        %331 = vmatpush1.msra.mxu0 0.0
        %332 = vmatprep.subr.mxu0 0.0
        %333 = vmatpush1.msra.mxu0 0.0
        %334 = vmatprep.subr.mxu0 0.0
        %335 = vmatpush1.msra.mxu0 0.0
        %336 = vmatprep.subr.mxu0 0.0
        %337 = vmatpush1.msra.mxu0 0.0
        %338 = vmatprep.subr.mxu0 0.0
        %339 = vmatpush1.msra.mxu0 0.0
        %340 = vmatprep.subr.mxu0 0.0
        %341 = vmatpush1.msra.mxu0 0.0
        %342 = vmatprep.subr.mxu0 %v318
        %343 = vmatpush1.msra.mxu0 %v315
        %344 = vmatprep.subr.mxu0 %v293
        %345 = vmatpush1.msra.mxu0 %v292
        %346 = vmatprep.subr.mxu0 %v291
        %347 = vmatpush1.msra.mxu0 %v290
        %348 = vmatprep.subr.mxu0 %v289
        %349 = vmatpush1.msra.mxu0 %v288
        %350 = vmatprep.subr.mxu0 %v287
        %351 = vmatpush1.msra.mxu0 %v286
        %352 = vmatprep.subr.mxu0 0.0
        %353 = vmatpush2.msra.mxu0 0.0
        %354 = vmatprep.subr.mxu0 0.0
        %355 = vmatpush2.msra.mxu0 0.0
        %356 = vmatprep.subr.mxu0 0.0
        %357 = vmatpush2.msra.mxu0 0.0
        %358 = vmatprep.subr.mxu0 0.0
        %359 = vmatpush2.msra.mxu0 0.0
        %360 = vmatprep.subr.mxu0 0.0
        %361 = vmatpush2.msra.mxu0 0.0
        %362 = vmatprep.subr.mxu0 0.0
        %363 = vmatpush2.msra.mxu0 0.0
        %364 = vmatprep.subr.mxu0 0.0
        %365 = vmatpush2.msra.mxu0 0.0
        %366 = vmatprep.subr.mxu0 0.0
        %367 = vmatpush2.msra.mxu0 0.0
        %368 = vmatprep.subr.mxu0 0.0
        %369 = vmatpush2.msra.mxu0 0.0
        %370 = vmatprep.subr.mxu0 0.0
        %371 = vmatpush2.msra.mxu0 0.0
        %372 = vmatprep.subr.mxu0 0.0
        %373 = vmatpush2.msra.mxu0 0.0
        %374 = vmatprep.subr.mxu0 0.0
        %375 = vmatpush2.msra.mxu0 0.0
        %376 = vmatprep.subr.mxu0 0.0
        %377 = vmatpush2.msra.mxu0 0.0
        %378 = vmatprep.subr.mxu0 0.0
        %379 = vmatpush2.msra.mxu0 0.0
        %380 = vmatprep.subr.mxu0 0.0
        %381 = vmatpush2.msra.mxu0 0.0
        %382 = vmatprep.subr.mxu0 0.0
        %383 = vmatpush2.msra.mxu0 0.0
        %384 = vmatprep.mubr.f32.mxu0 0.0
        %385 = vmatmul.mubr.f32.gmra.mxu0 %v308
        %v386 = vpop.f32.mrf.mxu0
        %v387 = vadd.f32 %v299, %v386
        %v388 = vpop.f32.mrf.mxu0
        %v389 = vadd.f32 %v299, %v388
        %390 = vmatprep.mubr.f32.mxu0 0.0
        %391 = vmatmul.mubr.f32.gmra.mxu0 %v311
        %v392 = vpop.f32.mrf.mxu0
        %v393 = vadd.f32 %v304, %v392
        %v394 = vpop.f32.mrf.mxu0
        %v395 = vadd.f32 %v304, %v394
        %396 = vdwg.mxu0
        %v397 = vmax.f32 %v387, 0.0
        %v398 = vmax.f32 %v389, 0.0
        %v399 = vxor.u32 %v393, 2147483648
        %v400 = vxor.u32 %v395, 2147483648
        %v401 = vmul.f32 %v399, 1.442695
        %v402 = vpow.pop %v401
        %v403 = vmul.f32 %v400, 1.442695
        %v404 = vpow.pop %v403
        %v405 = vadd.f32 %v402, 1.0
        %v406 = vadd.f32 %v404, 1.0
        %v407 = vrcp.pop %v405
        %v408 = vmul.f32 1.0, %v407
        %v409 = vrcp.pop %v406
        %v410 = vmul.f32 1.0, %v409
        %v411 = vmul.f32 %v397, %v408
        %v412 = vmul.f32 %v398, %v410
        %413 = vst [vmem:[#allocation2] sm:$0xff] %v411
        %414 = vst [vmem:[#allocation2 + $0x8] sm:$0xff] %v412
        %s415 = scalar_lea.vmem %s280, 80
        %v416 = vld [vmem:[%s415] sm:$0xff]
        %v417 = vld [vmem:[%s415 + $0x8] sm:$0xff]
        %v418 = vld [vmem:[%s415 + $0x10] sm:$0xff]
        %v419 = vld [vmem:[%s415 + $0x18] sm:$0xff]
        %v420 = vld [vmem:[%s415 + $0x20] sm:$0xff]
        %v421 = vld [vmem:[%s415 + $0x28] sm:$0xff]
        %v422 = vld [vmem:[%s415 + $0x30] sm:$0xff]
        %v423 = vld [vmem:[%s415 + $0x38] sm:$0xff]
        %v424 = vld [vmem:[%s415 + $0x40] sm:$0xf]
        %v425 = vld [vmem:[%s415 + $0x48] sm:$0xf]
        %v427 = vsel %vm313, %v424, 0
        %v430 = vsel %vm313, %v425, 0
        %432 = vmatprep.subr.mxu0 0.0
        %433 = vmatpush1.msra.mxu0 0.0
        %434 = vmatprep.subr.mxu0 0.0
        %435 = vmatpush1.msra.mxu0 0.0
        %436 = vmatprep.subr.mxu0 0.0
        %437 = vmatpush1.msra.mxu0 0.0
        %438 = vmatprep.subr.mxu0 0.0
        %439 = vmatpush1.msra.mxu0 0.0
        %440 = vmatprep.subr.mxu0 0.0
        %441 = vmatpush1.msra.mxu0 0.0
        %442 = vmatprep.subr.mxu0 0.0
        %443 = vmatpush1.msra.mxu0 0.0
        %444 = vmatprep.subr.mxu0 0.0
        %445 = vmatpush1.msra.mxu0 0.0
        %446 = vmatprep.subr.mxu0 0.0
        %447 = vmatpush1.msra.mxu0 0.0
        %448 = vmatprep.subr.mxu0 0.0
        %449 = vmatpush1.msra.mxu0 0.0
        %450 = vmatprep.subr.mxu0 0.0
        %451 = vmatpush1.msra.mxu0 0.0
        %452 = vmatprep.subr.mxu0 0.0
        %453 = vmatpush1.msra.mxu0 0.0
        %454 = vmatprep.subr.mxu0 %v430
        %455 = vmatpush1.msra.mxu0 %v427
        %456 = vmatprep.subr.mxu0 %v423
        %457 = vmatpush1.msra.mxu0 %v422
        %458 = vmatprep.subr.mxu0 %v421
        %459 = vmatpush1.msra.mxu0 %v420
        %460 = vmatprep.subr.mxu0 %v419
        %461 = vmatpush1.msra.mxu0 %v418
        %462 = vmatprep.subr.mxu0 %v417
        %463 = vmatpush1.msra.mxu0 %v416
        %464 = vmatprep.subr.mxu0 0.0
        %465 = vmatpush2.msra.mxu0 0.0
        %466 = vmatprep.subr.mxu0 0.0
        %467 = vmatpush2.msra.mxu0 0.0
        %468 = vmatprep.subr.mxu0 0.0
        %469 = vmatpush2.msra.mxu0 0.0
        %470 = vmatprep.subr.mxu0 0.0
        %471 = vmatpush2.msra.mxu0 0.0
        %472 = vmatprep.subr.mxu0 0.0
        %473 = vmatpush2.msra.mxu0 0.0
        %474 = vmatprep.subr.mxu0 0.0
        %475 = vmatpush2.msra.mxu0 0.0
        %476 = vmatprep.subr.mxu0 0.0
        %477 = vmatpush2.msra.mxu0 0.0
        %478 = vmatprep.subr.mxu0 0.0
        %479 = vmatpush2.msra.mxu0 0.0
        %480 = vmatprep.subr.mxu0 0.0
        %481 = vmatpush2.msra.mxu0 0.0
        %482 = vmatprep.subr.mxu0 0.0
        %483 = vmatpush2.msra.mxu0 0.0
        %484 = vmatprep.subr.mxu0 0.0
        %485 = vmatpush2.msra.mxu0 0.0
        %486 = vmatprep.subr.mxu0 0.0
        %487 = vmatpush2.msra.mxu0 0.0
        %488 = vmatprep.subr.mxu0 0.0
        %489 = vmatpush2.msra.mxu0 0.0
        %490 = vmatprep.subr.mxu0 0.0
        %491 = vmatpush2.msra.mxu0 0.0
        %492 = vmatprep.subr.mxu0 0.0
        %493 = vmatpush2.msra.mxu0 0.0
        %494 = vmatprep.subr.mxu0 0.0
        %495 = vmatpush2.msra.mxu0 0.0
        %496 = vmatprep.mubr.f32.mxu0 0.0
        %497 = vmatmul.mubr.f32.gmra.mxu0 %v308
        %v498 = vpop.f32.mrf.mxu0
        %v499 = vadd.f32 %v299, %v498
        %v500 = vpop.f32.mrf.mxu0
        %v501 = vadd.f32 %v299, %v500
        %502 = vmatprep.mubr.f32.mxu0 0.0
        %503 = vmatmul.mubr.f32.gmra.mxu0 %v311
        %v504 = vpop.f32.mrf.mxu0
        %v505 = vadd.f32 %v304, %v504
        %v506 = vpop.f32.mrf.mxu0
        %v507 = vadd.f32 %v304, %v506
        %508 = vdwg.mxu0
        %v509 = vmax.f32 %v499, 0.0
        %v510 = vmax.f32 %v501, 0.0
        %v511 = vxor.u32 %v505, 2147483648
        %v512 = vxor.u32 %v507, 2147483648
        %v513 = vmul.f32 %v511, 1.442695
        %v514 = vpow.pop %v513
        %v515 = vmul.f32 %v512, 1.442695
        %v516 = vpow.pop %v515
        %v517 = vadd.f32 %v514, 1.0
        %v518 = vadd.f32 %v516, 1.0
        %v519 = vrcp.pop %v517
        %v520 = vmul.f32 1.0, %v519
        %v521 = vrcp.pop %v518
        %v522 = vmul.f32 1.0, %v521
        %v523 = vmul.f32 %v509, %v520
        %v524 = vmul.f32 %v510, %v522
        %s525 = scalar_lea.vmem [#allocation2], 16
        %526 = vst [vmem:[%s525] sm:$0xff] %v523
        %527 = vst [vmem:[%s525 + $0x8] sm:$0xff] %v524
        %s528 = scalar_lea.vmem %s280, 160
        %v529 = vld [vmem:[%s528] sm:$0xff]
        %v530 = vld [vmem:[%s528 + $0x8] sm:$0xff]
        %v531 = vld [vmem:[%s528 + $0x10] sm:$0xff]
        %v532 = vld [vmem:[%s528 + $0x18] sm:$0xff]
        %v533 = vld [vmem:[%s528 + $0x20] sm:$0xff]
        %v534 = vld [vmem:[%s528 + $0x28] sm:$0xff]
        %v535 = vld [vmem:[%s528 + $0x30] sm:$0xff]
        %v536 = vld [vmem:[%s528 + $0x38] sm:$0xff]
        %v537 = vld [vmem:[%s528 + $0x40] sm:$0xf]
        %v538 = vld [vmem:[%s528 + $0x48] sm:$0xf]
        %v540 = vsel %vm313, %v537, 0
        %v543 = vsel %vm313, %v538, 0
        %545 = vmatprep.subr.mxu0 0.0
        %546 = vmatpush1.msra.mxu0 0.0
        %547 = vmatprep.subr.mxu0 0.0
        %548 = vmatpush1.msra.mxu0 0.0
        %549 = vmatprep.subr.mxu0 0.0
        %550 = vmatpush1.msra.mxu0 0.0
        %551 = vmatprep.subr.mxu0 0.0
        %552 = vmatpush1.msra.mxu0 0.0
        %553 = vmatprep.subr.mxu0 0.0
        %554 = vmatpush1.msra.mxu0 0.0
        %555 = vmatprep.subr.mxu0 0.0
        %556 = vmatpush1.msra.mxu0 0.0
        %557 = vmatprep.subr.mxu0 0.0
        %558 = vmatpush1.msra.mxu0 0.0
        %559 = vmatprep.subr.mxu0 0.0
        %560 = vmatpush1.msra.mxu0 0.0
        %561 = vmatprep.subr.mxu0 0.0
        %562 = vmatpush1.msra.mxu0 0.0
        %563 = vmatprep.subr.mxu0 0.0
        %564 = vmatpush1.msra.mxu0 0.0
        %565 = vmatprep.subr.mxu0 0.0
        %566 = vmatpush1.msra.mxu0 0.0
        %567 = vmatprep.subr.mxu0 %v543
        %568 = vmatpush1.msra.mxu0 %v540
        %569 = vmatprep.subr.mxu0 %v536
        %570 = vmatpush1.msra.mxu0 %v535
        %571 = vmatprep.subr.mxu0 %v534
        %572 = vmatpush1.msra.mxu0 %v533
        %573 = vmatprep.subr.mxu0 %v532
        %574 = vmatpush1.msra.mxu0 %v531
        %575 = vmatprep.subr.mxu0 %v530
        %576 = vmatpush1.msra.mxu0 %v529
        %577 = vmatprep.subr.mxu0 0.0
        %578 = vmatpush2.msra.mxu0 0.0
        %579 = vmatprep.subr.mxu0 0.0
        %580 = vmatpush2.msra.mxu0 0.0
        %581 = vmatprep.subr.mxu0 0.0
        %582 = vmatpush2.msra.mxu0 0.0
        %583 = vmatprep.subr.mxu0 0.0
        %584 = vmatpush2.msra.mxu0 0.0
        %585 = vmatprep.subr.mxu0 0.0
        %586 = vmatpush2.msra.mxu0 0.0
        %587 = vmatprep.subr.mxu0 0.0
        %588 = vmatpush2.msra.mxu0 0.0
        %589 = vmatprep.subr.mxu0 0.0
        %590 = vmatpush2.msra.mxu0 0.0
        %591 = vmatprep.subr.mxu0 0.0
        %592 = vmatpush2.msra.mxu0 0.0
        %593 = vmatprep.subr.mxu0 0.0
        %594 = vmatpush2.msra.mxu0 0.0
        %595 = vmatprep.subr.mxu0 0.0
        %596 = vmatpush2.msra.mxu0 0.0
        %597 = vmatprep.subr.mxu0 0.0
        %598 = vmatpush2.msra.mxu0 0.0
        %599 = vmatprep.subr.mxu0 0.0
        %600 = vmatpush2.msra.mxu0 0.0
        %601 = vmatprep.subr.mxu0 0.0
        %602 = vmatpush2.msra.mxu0 0.0
        %603 = vmatprep.subr.mxu0 0.0
        %604 = vmatpush2.msra.mxu0 0.0
        %605 = vmatprep.subr.mxu0 0.0
        %606 = vmatpush2.msra.mxu0 0.0
        %607 = vmatprep.subr.mxu0 0.0
        %608 = vmatpush2.msra.mxu0 0.0
        %609 = vmatprep.mubr.f32.mxu0 0.0
        %610 = vmatmul.mubr.f32.gmra.mxu0 %v308
        %v611 = vpop.f32.mrf.mxu0
        %v612 = vadd.f32 %v299, %v611
        %v613 = vpop.f32.mrf.mxu0
        %v614 = vadd.f32 %v299, %v613
        %615 = vmatprep.mubr.f32.mxu0 0.0
        %616 = vmatmul.mubr.f32.gmra.mxu0 %v311
        %v617 = vpop.f32.mrf.mxu0
        %v618 = vadd.f32 %v304, %v617
        %v619 = vpop.f32.mrf.mxu0
        %v620 = vadd.f32 %v304, %v619
        %621 = vdwg.mxu0
        %v622 = vmax.f32 %v612, 0.0
        %v623 = vmax.f32 %v614, 0.0
        %v624 = vxor.u32 %v618, 2147483648
        %v625 = vxor.u32 %v620, 2147483648
        %v626 = vmul.f32 %v624, 1.442695
        %v627 = vpow.pop %v626
        %v628 = vmul.f32 %v625, 1.442695
        %v629 = vpow.pop %v628
        %v630 = vadd.f32 %v627, 1.0
        %v631 = vadd.f32 %v629, 1.0
        %v632 = vrcp.pop %v630
        %v633 = vmul.f32 1.0, %v632
        %v634 = vrcp.pop %v631
        %v635 = vmul.f32 1.0, %v634
        %v636 = vmul.f32 %v622, %v633
        %v637 = vmul.f32 %v623, %v635
        %s638 = scalar_lea.vmem [#allocation2], 32
        %639 = vst [vmem:[%s638] sm:$0xff] %v636
        %640 = vst [vmem:[%s638 + $0x8] sm:$0xff] %v637
        %s641 = scalar_lea.vmem %s280, 240
        %v642 = vld [vmem:[%s641] sm:$0xff]
        %v643 = vld [vmem:[%s641 + $0x8] sm:$0xff]
        %v644 = vld [vmem:[%s641 + $0x10] sm:$0xff]
        %v645 = vld [vmem:[%s641 + $0x18] sm:$0xff]
        %v646 = vld [vmem:[%s641 + $0x20] sm:$0xff]
        %v647 = vld [vmem:[%s641 + $0x28] sm:$0xff]
        %v648 = vld [vmem:[%s641 + $0x30] sm:$0xff]
        %v649 = vld [vmem:[%s641 + $0x38] sm:$0xff]
        %v650 = vld [vmem:[%s641 + $0x40] sm:$0xf]
        %v651 = vld [vmem:[%s641 + $0x48] sm:$0xf]
        %v653 = vsel %vm313, %v650, 0
        %v656 = vsel %vm313, %v651, 0
        %658 = vmatprep.subr.mxu0 0.0
        %659 = vmatpush1.msra.mxu0 0.0
        %660 = vmatprep.subr.mxu0 0.0
        %661 = vmatpush1.msra.mxu0 0.0
        %662 = vmatprep.subr.mxu0 0.0
        %663 = vmatpush1.msra.mxu0 0.0
        %664 = vmatprep.subr.mxu0 0.0
        %665 = vmatpush1.msra.mxu0 0.0
        %666 = vmatprep.subr.mxu0 0.0
        %667 = vmatpush1.msra.mxu0 0.0
        %668 = vmatprep.subr.mxu0 0.0
        %669 = vmatpush1.msra.mxu0 0.0
        %670 = vmatprep.subr.mxu0 0.0
        %671 = vmatpush1.msra.mxu0 0.0
        %672 = vmatprep.subr.mxu0 0.0
        %673 = vmatpush1.msra.mxu0 0.0
        %674 = vmatprep.subr.mxu0 0.0
        %675 = vmatpush1.msra.mxu0 0.0
        %676 = vmatprep.subr.mxu0 0.0
        %677 = vmatpush1.msra.mxu0 0.0
        %678 = vmatprep.subr.mxu0 0.0
        %679 = vmatpush1.msra.mxu0 0.0
        %680 = vmatprep.subr.mxu0 %v656
        %681 = vmatpush1.msra.mxu0 %v653
        %682 = vmatprep.subr.mxu0 %v649
        %683 = vmatpush1.msra.mxu0 %v648
        %684 = vmatprep.subr.mxu0 %v647
        %685 = vmatpush1.msra.mxu0 %v646
        %686 = vmatprep.subr.mxu0 %v645
        %687 = vmatpush1.msra.mxu0 %v644
        %688 = vmatprep.subr.mxu0 %v643
        %689 = vmatpush1.msra.mxu0 %v642
        %690 = vmatprep.subr.mxu0 0.0
        %691 = vmatpush2.msra.mxu0 0.0
        %692 = vmatprep.subr.mxu0 0.0
        %693 = vmatpush2.msra.mxu0 0.0
        %694 = vmatprep.subr.mxu0 0.0
        %695 = vmatpush2.msra.mxu0 0.0
        %696 = vmatprep.subr.mxu0 0.0
        %697 = vmatpush2.msra.mxu0 0.0
        %698 = vmatprep.subr.mxu0 0.0
        %699 = vmatpush2.msra.mxu0 0.0
        %700 = vmatprep.subr.mxu0 0.0
        %701 = vmatpush2.msra.mxu0 0.0
        %702 = vmatprep.subr.mxu0 0.0
        %703 = vmatpush2.msra.mxu0 0.0
        %704 = vmatprep.subr.mxu0 0.0
        %705 = vmatpush2.msra.mxu0 0.0
        %706 = vmatprep.subr.mxu0 0.0
        %707 = vmatpush2.msra.mxu0 0.0
        %708 = vmatprep.subr.mxu0 0.0
        %709 = vmatpush2.msra.mxu0 0.0
        %710 = vmatprep.subr.mxu0 0.0
        %711 = vmatpush2.msra.mxu0 0.0
        %712 = vmatprep.subr.mxu0 0.0
        %713 = vmatpush2.msra.mxu0 0.0
        %714 = vmatprep.subr.mxu0 0.0
        %715 = vmatpush2.msra.mxu0 0.0
        %716 = vmatprep.subr.mxu0 0.0
        %717 = vmatpush2.msra.mxu0 0.0
        %718 = vmatprep.subr.mxu0 0.0
        %719 = vmatpush2.msra.mxu0 0.0
        %720 = vmatprep.subr.mxu0 0.0
        %721 = vmatpush2.msra.mxu0 0.0
        %722 = vmatprep.mubr.f32.mxu0 0.0
        %723 = vmatmul.mubr.f32.gmra.mxu0 %v308
        %v724 = vpop.f32.mrf.mxu0
        %v725 = vadd.f32 %v299, %v724
        %v726 = vpop.f32.mrf.mxu0
        %v727 = vadd.f32 %v299, %v726
        %728 = vmatprep.mubr.f32.mxu0 0.0
        %729 = vmatmul.mubr.f32.gmra.mxu0 %v311
        %v730 = vpop.f32.mrf.mxu0
        %v731 = vadd.f32 %v304, %v730
        %v732 = vpop.f32.mrf.mxu0
        %v733 = vadd.f32 %v304, %v732
        %734 = vdwg.mxu0
        %v735 = vmax.f32 %v725, 0.0
        %v736 = vmax.f32 %v727, 0.0
        %v737 = vxor.u32 %v731, 2147483648
        %v738 = vxor.u32 %v733, 2147483648
        %v739 = vmul.f32 %v737, 1.442695
        %v740 = vpow.pop %v739
        %v741 = vmul.f32 %v738, 1.442695
        %v742 = vpow.pop %v741
        %v743 = vadd.f32 %v740, 1.0
        %v744 = vadd.f32 %v742, 1.0
        %v745 = vrcp.pop %v743
        %v746 = vmul.f32 1.0, %v745
        %v747 = vrcp.pop %v744
        %v748 = vmul.f32 1.0, %v747
        %v749 = vmul.f32 %v735, %v746
        %v750 = vmul.f32 %v736, %v748
        %s751 = scalar_lea.vmem [#allocation2], 48
        %752 = vst [vmem:[%s751] sm:$0xff] %v749
        %753 = vst [vmem:[%s751 + $0x8] sm:$0xff] %v750
        %v754 = vld [vmem:[#allocation2] ss:$8 sm:$0x3]
        %s755 = scalar_lea.vmem [#allocation2], 16
        %v756 = vld [vmem:[%s755] ss:$8 sm:$0x3]
        %s757 = scalar_lea.vmem [#allocation2], 32
        %v758 = vld [vmem:[%s757] ss:$8 sm:$0x3]
        %s759 = scalar_lea.vmem [#allocation2], 48
        %v760 = vld [vmem:[%s759] ss:$8 sm:$0x3]
        %s761 = scalar_lea.vmem [#allocation2], 1
        %v762 = vld [vmem:[%s761] ss:$8 sm:$0x3]
        %s763 = scalar_lea.vmem [#allocation2], 17
        %v764 = vld [vmem:[%s763] ss:$8 sm:$0x3]
        %s765 = scalar_lea.vmem [#allocation2], 33
        %v766 = vld [vmem:[%s765] ss:$8 sm:$0x3]
        %s767 = scalar_lea.vmem [#allocation2], 49
        %v768 = vld [vmem:[%s767] ss:$8 sm:$0x3]
        %s769 = scalar_lea.vmem [#allocation2], 2
        %v770 = vld [vmem:[%s769] ss:$8 sm:$0x3]
        %s771 = scalar_lea.vmem [#allocation2], 18
        %v772 = vld [vmem:[%s771] ss:$8 sm:$0x3]
        %s773 = scalar_lea.vmem [#allocation2], 34
        %v774 = vld [vmem:[%s773] ss:$8 sm:$0x3]
        %s775 = scalar_lea.vmem [#allocation2], 50
        %v776 = vld [vmem:[%s775] ss:$8 sm:$0x3]
        %s777 = scalar_lea.vmem [#allocation2], 3
        %v778 = vld [vmem:[%s777] ss:$8 sm:$0x3]
        %s779 = scalar_lea.vmem [#allocation2], 19
        %v780 = vld [vmem:[%s779] ss:$8 sm:$0x3]
        %s781 = scalar_lea.vmem [#allocation2], 35
        %v782 = vld [vmem:[%s781] ss:$8 sm:$0x3]
        %s783 = scalar_lea.vmem [#allocation2], 51
        %v784 = vld [vmem:[%s783] ss:$8 sm:$0x3]
        %s785 = scalar_lea.vmem [#allocation2], 4
        %v786 = vld [vmem:[%s785] ss:$8 sm:$0x3]
        %s787 = scalar_lea.vmem [#allocation2], 20
        %v788 = vld [vmem:[%s787] ss:$8 sm:$0x3]
        %s789 = scalar_lea.vmem [#allocation2], 36
        %v790 = vld [vmem:[%s789] ss:$8 sm:$0x3]
        %s791 = scalar_lea.vmem [#allocation2], 52
        %v792 = vld [vmem:[%s791] ss:$8 sm:$0x3]
        %s793 = scalar_lea.vmem [#allocation2], 5
        %v794 = vld [vmem:[%s793] ss:$8 sm:$0x3]
        %s795 = scalar_lea.vmem [#allocation2], 21
        %v796 = vld [vmem:[%s795] ss:$8 sm:$0x3]
        %s797 = scalar_lea.vmem [#allocation2], 37
        %v798 = vld [vmem:[%s797] ss:$8 sm:$0x3]
        %s799 = scalar_lea.vmem [#allocation2], 53
        %v800 = vld [vmem:[%s799] ss:$8 sm:$0x3]
        %s801 = scalar_lea.vmem [#allocation2], 6
        %v802 = vld [vmem:[%s801] ss:$8 sm:$0x3]
        %s803 = scalar_lea.vmem [#allocation2], 22
        %v804 = vld [vmem:[%s803] ss:$8 sm:$0x3]
        %s805 = scalar_lea.vmem [#allocation2], 38
        %v806 = vld [vmem:[%s805] ss:$8 sm:$0x3]
        %s807 = scalar_lea.vmem [#allocation2], 54
        %v808 = vld [vmem:[%s807] ss:$8 sm:$0x3]
        %s809 = scalar_lea.vmem [#allocation2], 7
        %v810 = vld [vmem:[%s809] ss:$8 sm:$0x3]
        %s811 = scalar_lea.vmem [#allocation2], 23
        %v812 = vld [vmem:[%s811] ss:$8 sm:$0x3]
        %s813 = scalar_lea.vmem [#allocation2], 39
        %v814 = vld [vmem:[%s813] ss:$8 sm:$0x3]
        %s815 = scalar_lea.vmem [#allocation2], 55
        %v816 = vld [vmem:[%s815] ss:$8 sm:$0x3]
        %v821 = vcombine.low %v754, %v756
        %v822 = vcombine.low %v758, %v760
        %v824 = vunpack.c.l.s4 1966171168
        %v825 = vunpack.c.0.s8 %v824
        %v826 = vlaneseq
        %v827 = vshrl.u32 %v826, 7
        %v828 = vsub.s32 %v825, %v827
        %v829 = vrot.slane %v821, %v828
        %v831 = vunpack.c.l.s4 1966171168
        %v832 = vunpack.c.0.s8 %v831
        %v833 = vlaneseq
        %v834 = vshrl.u32 %v833, 7
        %v835 = vsub.s32 %v832, %v834
        %v836 = vrot.slane %v822, %v835
        %v837 = vcombine.low %v829, %v836
        %v838 = vcombine.high %v829, %v836
        %v840 = vunpack.c.l.s4 1966171168
        %v841 = vunpack.c.0.s8 %v840
        %v842 = vlaneseq
        %v843 = vshrl.u32 %v842, 7
        %v844 = vsub.s32 %v841, %v843
        %v845 = vrot.slane %v837, %v844
        %v847 = vunpack.c.l.s4 1966171168
        %v848 = vunpack.c.0.s8 %v847
        %v849 = vlaneseq
        %v850 = vshrl.u32 %v849, 7
        %v851 = vsub.s32 %v848, %v850
        %v852 = vrot.slane %v838, %v851
        %v859 = vcombine.low %v762, %v764
        %v860 = vcombine.low %v766, %v768
        %v862 = vunpack.c.l.s4 1966171168
        %v863 = vunpack.c.0.s8 %v862
        %v864 = vlaneseq
        %v865 = vshrl.u32 %v864, 7
        %v866 = vsub.s32 %v863, %v865
        %v867 = vrot.slane %v859, %v866
        %v869 = vunpack.c.l.s4 1966171168
        %v870 = vunpack.c.0.s8 %v869
        %v871 = vlaneseq
        %v872 = vshrl.u32 %v871, 7
        %v873 = vsub.s32 %v870, %v872
        %v874 = vrot.slane %v860, %v873
        %v875 = vcombine.low %v867, %v874
        %v876 = vcombine.high %v867, %v874
        %v878 = vunpack.c.l.s4 1966171168
        %v879 = vunpack.c.0.s8 %v878
        %v880 = vlaneseq
        %v881 = vshrl.u32 %v880, 7
        %v882 = vsub.s32 %v879, %v881
        %v883 = vrot.slane %v875, %v882
        %v885 = vunpack.c.l.s4 1966171168
        %v886 = vunpack.c.0.s8 %v885
        %v887 = vlaneseq
        %v888 = vshrl.u32 %v887, 7
        %v889 = vsub.s32 %v886, %v888
        %v890 = vrot.slane %v876, %v889
        %v897 = vcombine.low %v770, %v772
        %v898 = vcombine.low %v774, %v776
        %v900 = vunpack.c.l.s4 1966171168
        %v901 = vunpack.c.0.s8 %v900
        %v902 = vlaneseq
        %v903 = vshrl.u32 %v902, 7
        %v904 = vsub.s32 %v901, %v903
        %v905 = vrot.slane %v897, %v904
        %v907 = vunpack.c.l.s4 1966171168
        %v908 = vunpack.c.0.s8 %v907
        %v909 = vlaneseq
        %v910 = vshrl.u32 %v909, 7
        %v911 = vsub.s32 %v908, %v910
        %v912 = vrot.slane %v898, %v911
        %v913 = vcombine.low %v905, %v912
        %v914 = vcombine.high %v905, %v912
        %v916 = vunpack.c.l.s4 1966171168
        %v917 = vunpack.c.0.s8 %v916
        %v918 = vlaneseq
        %v919 = vshrl.u32 %v918, 7
        %v920 = vsub.s32 %v917, %v919
        %v921 = vrot.slane %v913, %v920
        %v923 = vunpack.c.l.s4 1966171168
        %v924 = vunpack.c.0.s8 %v923
        %v925 = vlaneseq
        %v926 = vshrl.u32 %v925, 7
        %v927 = vsub.s32 %v924, %v926
        %v928 = vrot.slane %v914, %v927
        %v935 = vcombine.low %v778, %v780
        %v936 = vcombine.low %v782, %v784
        %v938 = vunpack.c.l.s4 1966171168
        %v939 = vunpack.c.0.s8 %v938
        %v940 = vlaneseq
        %v941 = vshrl.u32 %v940, 7
        %v942 = vsub.s32 %v939, %v941
        %v943 = vrot.slane %v935, %v942
        %v945 = vunpack.c.l.s4 1966171168
        %v946 = vunpack.c.0.s8 %v945
        %v947 = vlaneseq
        %v948 = vshrl.u32 %v947, 7
        %v949 = vsub.s32 %v946, %v948
        %v950 = vrot.slane %v936, %v949
        %v951 = vcombine.low %v943, %v950
        %v952 = vcombine.high %v943, %v950
        %v954 = vunpack.c.l.s4 1966171168
        %v955 = vunpack.c.0.s8 %v954
        %v956 = vlaneseq
        %v957 = vshrl.u32 %v956, 7
        %v958 = vsub.s32 %v955, %v957
        %v959 = vrot.slane %v951, %v958
        %v961 = vunpack.c.l.s4 1966171168
        %v962 = vunpack.c.0.s8 %v961
        %v963 = vlaneseq
        %v964 = vshrl.u32 %v963, 7
        %v965 = vsub.s32 %v962, %v964
        %v966 = vrot.slane %v952, %v965
        %v973 = vcombine.low %v786, %v788
        %v974 = vcombine.low %v790, %v792
        %v976 = vunpack.c.l.s4 1966171168
        %v977 = vunpack.c.0.s8 %v976
        %v978 = vlaneseq
        %v979 = vshrl.u32 %v978, 7
        %v980 = vsub.s32 %v977, %v979
        %v981 = vrot.slane %v973, %v980
        %v983 = vunpack.c.l.s4 1966171168
        %v984 = vunpack.c.0.s8 %v983
        %v985 = vlaneseq
        %v986 = vshrl.u32 %v985, 7
        %v987 = vsub.s32 %v984, %v986
        %v988 = vrot.slane %v974, %v987
        %v989 = vcombine.low %v981, %v988
        %v990 = vcombine.high %v981, %v988
        %v992 = vunpack.c.l.s4 1966171168
        %v993 = vunpack.c.0.s8 %v992
        %v994 = vlaneseq
        %v995 = vshrl.u32 %v994, 7
        %v996 = vsub.s32 %v993, %v995
        %v997 = vrot.slane %v989, %v996
        %v999 = vunpack.c.l.s4 1966171168
        %v1000 = vunpack.c.0.s8 %v999
        %v1001 = vlaneseq
        %v1002 = vshrl.u32 %v1001, 7
        %v1003 = vsub.s32 %v1000, %v1002
        %v1004 = vrot.slane %v990, %v1003
        %v1011 = vcombine.low %v794, %v796
        %v1012 = vcombine.low %v798, %v800
        %v1014 = vunpack.c.l.s4 1966171168
        %v1015 = vunpack.c.0.s8 %v1014
        %v1016 = vlaneseq
        %v1017 = vshrl.u32 %v1016, 7
        %v1018 = vsub.s32 %v1015, %v1017
        %v1019 = vrot.slane %v1011, %v1018
        %v1021 = vunpack.c.l.s4 1966171168
        %v1022 = vunpack.c.0.s8 %v1021
        %v1023 = vlaneseq
        %v1024 = vshrl.u32 %v1023, 7
        %v1025 = vsub.s32 %v1022, %v1024
        %v1026 = vrot.slane %v1012, %v1025
        %v1027 = vcombine.low %v1019, %v1026
        %v1028 = vcombine.high %v1019, %v1026
        %v1030 = vunpack.c.l.s4 1966171168
        %v1031 = vunpack.c.0.s8 %v1030
        %v1032 = vlaneseq
        %v1033 = vshrl.u32 %v1032, 7
        %v1034 = vsub.s32 %v1031, %v1033
        %v1035 = vrot.slane %v1027, %v1034
        %v1037 = vunpack.c.l.s4 1966171168
        %v1038 = vunpack.c.0.s8 %v1037
        %v1039 = vlaneseq
        %v1040 = vshrl.u32 %v1039, 7
        %v1041 = vsub.s32 %v1038, %v1040
        %v1042 = vrot.slane %v1028, %v1041
        %v1049 = vcombine.low %v802, %v804
        %v1050 = vcombine.low %v806, %v808
        %v1052 = vunpack.c.l.s4 1966171168
        %v1053 = vunpack.c.0.s8 %v1052
        %v1054 = vlaneseq
        %v1055 = vshrl.u32 %v1054, 7
        %v1056 = vsub.s32 %v1053, %v1055
        %v1057 = vrot.slane %v1049, %v1056
        %v1059 = vunpack.c.l.s4 1966171168
        %v1060 = vunpack.c.0.s8 %v1059
        %v1061 = vlaneseq
        %v1062 = vshrl.u32 %v1061, 7
        %v1063 = vsub.s32 %v1060, %v1062
        %v1064 = vrot.slane %v1050, %v1063
        %v1065 = vcombine.low %v1057, %v1064
        %v1066 = vcombine.high %v1057, %v1064
        %v1068 = vunpack.c.l.s4 1966171168
        %v1069 = vunpack.c.0.s8 %v1068
        %v1070 = vlaneseq
        %v1071 = vshrl.u32 %v1070, 7
        %v1072 = vsub.s32 %v1069, %v1071
        %v1073 = vrot.slane %v1065, %v1072
        %v1075 = vunpack.c.l.s4 1966171168
        %v1076 = vunpack.c.0.s8 %v1075
        %v1077 = vlaneseq
        %v1078 = vshrl.u32 %v1077, 7
        %v1079 = vsub.s32 %v1076, %v1078
        %v1080 = vrot.slane %v1066, %v1079
        %v1087 = vcombine.low %v810, %v812
        %v1088 = vcombine.low %v814, %v816
        %v1090 = vunpack.c.l.s4 1966171168
        %v1091 = vunpack.c.0.s8 %v1090
        %v1092 = vlaneseq
        %v1093 = vshrl.u32 %v1092, 7
        %v1094 = vsub.s32 %v1091, %v1093
        %v1095 = vrot.slane %v1087, %v1094
        %v1097 = vunpack.c.l.s4 1966171168
        %v1098 = vunpack.c.0.s8 %v1097
        %v1099 = vlaneseq
        %v1100 = vshrl.u32 %v1099, 7
        %v1101 = vsub.s32 %v1098, %v1100
        %v1102 = vrot.slane %v1088, %v1101
        %v1103 = vcombine.low %v1095, %v1102
        %v1104 = vcombine.high %v1095, %v1102
        %v1106 = vunpack.c.l.s4 1966171168
        %v1107 = vunpack.c.0.s8 %v1106
        %v1108 = vlaneseq
        %v1109 = vshrl.u32 %v1108, 7
        %v1110 = vsub.s32 %v1107, %v1109
        %v1111 = vrot.slane %v1103, %v1110
        %v1113 = vunpack.c.l.s4 1966171168
        %v1114 = vunpack.c.0.s8 %v1113
        %v1115 = vlaneseq
        %v1116 = vshrl.u32 %v1115, 7
        %v1117 = vsub.s32 %v1114, %v1116
        %v1118 = vrot.slane %v1104, %v1117
        %v1121 = vld [vmem:[%s3] sm:$0xff]
        %v1122 = vld [vmem:[%s3 + $0x8] sm:$0xff]
        %v1123 = vld [vmem:[%s3 + $0x10] sm:$0xff]
        %v1124 = vld [vmem:[%s3 + $0x18] sm:$0xff]
        %v1125 = vld [vmem:[%s3 + $0x20] sm:$0xff]
        %v1126 = vld [vmem:[%s3 + $0x28] sm:$0xff]
        %v1127 = vld [vmem:[%s3 + $0x30] sm:$0xff]
        %v1128 = vld [vmem:[%s3 + $0x38] sm:$0xff]
        %v1129 = vld [vmem:[%s3 + $0x40] sm:$0xff]
        %v1130 = vld [vmem:[%s3 + $0x48] sm:$0xff]
        %v1131 = vld [vmem:[%s3 + $0x50] sm:$0xff]
        %v1132 = vld [vmem:[%s3 + $0x58] sm:$0xff]
        %v1133 = vld [vmem:[%s3 + $0x60] sm:$0xff]
        %v1134 = vld [vmem:[%s3 + $0x68] sm:$0xff]
        %v1135 = vld [vmem:[%s3 + $0x70] sm:$0xff]
        %v1136 = vld [vmem:[%s3 + $0x78] sm:$0xff]
        %v1137 = vld [vmem:[%s3 + $0x80] sm:$0xff]
        %v1138 = vld [vmem:[%s3 + $0x88] sm:$0xff]
        %v1139 = vld [vmem:[%s3 + $0x90] sm:$0xff]
        %v1140 = vld [vmem:[%s3 + $0x98] sm:$0xff]
        %v1141 = vld [vmem:[%s3 + $0xa0] sm:$0xff]
        %v1142 = vld [vmem:[%s3 + $0xa8] sm:$0xff]
        %v1143 = vld [vmem:[%s3 + $0xb0] sm:$0xff]
        %v1144 = vld [vmem:[%s3 + $0xb8] sm:$0xff]
        %v1145 = vld [vmem:[%s3 + $0xc0] sm:$0xff]
        %v1146 = vld [vmem:[%s3 + $0xc8] sm:$0xff]
        %v1147 = vld [vmem:[%s3 + $0xd0] sm:$0xff]
        %v1148 = vld [vmem:[%s3 + $0xd8] sm:$0xff]
        %v1149 = vld [vmem:[%s3 + $0xe0] sm:$0xff]
        %v1150 = vld [vmem:[%s3 + $0xe8] sm:$0xff]
        %v1151 = vld [vmem:[%s3 + $0xf0] sm:$0xff]
        %v1152 = vld [vmem:[%s3 + $0xf8] sm:$0xff]
        %v1153 = vld [vmem:[%s3 + $0x100] sm:$0xff]
        %v1154 = vld [vmem:[%s3 + $0x108] sm:$0xff]
        %v1155 = vld [vmem:[%s3 + $0x110] sm:$0xff]
        %v1156 = vld [vmem:[%s3 + $0x118] sm:$0xff]
        %v1157 = vld [vmem:[%s3 + $0x120] sm:$0xff]
        %v1158 = vld [vmem:[%s3 + $0x128] sm:$0xff]
        %v1159 = vld [vmem:[%s3 + $0x130] sm:$0xff]
        %v1160 = vld [vmem:[%s3 + $0x138] sm:$0xff]
        %v1161 = vld [vmem:[%s3 + $0x140] sm:$0xff]
        %v1162 = vld [vmem:[%s3 + $0x148] sm:$0xff]
        %v1163 = vld [vmem:[%s3 + $0x150] sm:$0xff]
        %v1164 = vld [vmem:[%s3 + $0x158] sm:$0xff]
        %v1165 = vld [vmem:[%s3 + $0x160] sm:$0xff]
        %v1166 = vld [vmem:[%s3 + $0x168] sm:$0xff]
        %v1167 = vld [vmem:[%s3 + $0x170] sm:$0xff]
        %v1168 = vld [vmem:[%s3 + $0x178] sm:$0xff]
        %v1169 = vld [vmem:[%s3 + $0x180] sm:$0xff]
        %v1170 = vld [vmem:[%s3 + $0x188] sm:$0xff]
        %v1171 = vld [vmem:[%s3 + $0x190] sm:$0xff]
        %v1172 = vld [vmem:[%s3 + $0x198] sm:$0xff]
        %v1173 = vld [vmem:[%s3 + $0x1a0] sm:$0xff]
        %v1174 = vld [vmem:[%s3 + $0x1a8] sm:$0xff]
        %v1175 = vld [vmem:[%s3 + $0x1b0] sm:$0xff]
        %v1176 = vld [vmem:[%s3 + $0x1b8] sm:$0xff]
        %v1177 = vld [vmem:[%s3 + $0x1c0] sm:$0xff]
        %v1178 = vld [vmem:[%s3 + $0x1c8] sm:$0xff]
        %v1179 = vld [vmem:[%s3 + $0x1d0] sm:$0xff]
        %v1180 = vld [vmem:[%s3 + $0x1d8] sm:$0xff]
        %v1181 = vld [vmem:[%s3 + $0x1e0] sm:$0xff]
        %v1182 = vld [vmem:[%s3 + $0x1e8] sm:$0xff]
        %v1183 = vld [vmem:[%s3 + $0x1f0] sm:$0xff]
        %v1184 = vld [vmem:[%s3 + $0x1f8] sm:$0xff]
        %v1185 = vld [vmem:[%s3 + $0x200] sm:$0xff]
        %v1186 = vld [vmem:[%s3 + $0x208] sm:$0xff]
        %v1187 = vld [vmem:[%s3 + $0x210] sm:$0xff]
        %v1188 = vld [vmem:[%s3 + $0x218] sm:$0xff]
        %v1189 = vld [vmem:[%s3 + $0x220] sm:$0xff]
        %v1190 = vld [vmem:[%s3 + $0x228] sm:$0xff]
        %v1191 = vld [vmem:[%s3 + $0x230] sm:$0xff]
        %v1192 = vld [vmem:[%s3 + $0x238] sm:$0xff]
        %v1193 = vld [vmem:[%s3 + $0x240] sm:$0xff]
        %v1194 = vld [vmem:[%s3 + $0x248] sm:$0xff]
        %v1195 = vld [vmem:[%s3 + $0x250] sm:$0xff]
        %v1196 = vld [vmem:[%s3 + $0x258] sm:$0xff]
        %v1197 = vld [vmem:[%s3 + $0x260] sm:$0xff]
        %v1198 = vld [vmem:[%s3 + $0x268] sm:$0xff]
        %v1199 = vld [vmem:[%s3 + $0x270] sm:$0xff]
        %v1200 = vld [vmem:[%s3 + $0x278] sm:$0xff]
        %v1201 = vld [vmem:[%s3 + $0x280] sm:$0xff]
        %v1202 = vld [vmem:[%s3 + $0x288] sm:$0xff]
        %v1203 = vld [vmem:[%s3 + $0x290] sm:$0xff]
        %v1204 = vld [vmem:[%s3 + $0x298] sm:$0xff]
        %v1205 = vld [vmem:[%s3 + $0x2a0] sm:$0xff]
        %v1206 = vld [vmem:[%s3 + $0x2a8] sm:$0xff]
        %v1207 = vld [vmem:[%s3 + $0x2b0] sm:$0xff]
        %v1208 = vld [vmem:[%s3 + $0x2b8] sm:$0xff]
        %v1209 = vld [vmem:[%s3 + $0x2c0] sm:$0xff]
        %v1210 = vld [vmem:[%s3 + $0x2c8] sm:$0xff]
        %v1211 = vld [vmem:[%s3 + $0x2d0] sm:$0xff]
        %v1212 = vld [vmem:[%s3 + $0x2d8] sm:$0xff]
        %v1213 = vld [vmem:[%s3 + $0x2e0] sm:$0xff]
        %v1214 = vld [vmem:[%s3 + $0x2e8] sm:$0xff]
        %v1215 = vld [vmem:[%s3 + $0x2f0] sm:$0xff]
        %v1216 = vld [vmem:[%s3 + $0x2f8] sm:$0xff]
        %v1217 = vld [vmem:[%s3 + $0x300] sm:$0xff]
        %v1218 = vld [vmem:[%s3 + $0x308] sm:$0xff]
        %v1219 = vld [vmem:[%s3 + $0x310] sm:$0xff]
        %v1220 = vld [vmem:[%s3 + $0x318] sm:$0xff]
        %v1221 = vld [vmem:[%s3 + $0x320] sm:$0xff]
        %v1222 = vld [vmem:[%s3 + $0x328] sm:$0xff]
        %v1223 = vld [vmem:[%s3 + $0x330] sm:$0xff]
        %v1224 = vld [vmem:[%s3 + $0x338] sm:$0xff]
        %v1225 = vld [vmem:[%s3 + $0x340] sm:$0xff]
        %v1226 = vld [vmem:[%s3 + $0x348] sm:$0xff]
        %v1227 = vld [vmem:[%s3 + $0x350] sm:$0xff]
        %v1228 = vld [vmem:[%s3 + $0x358] sm:$0xff]
        %v1229 = vld [vmem:[%s3 + $0x360] sm:$0xff]
        %v1230 = vld [vmem:[%s3 + $0x368] sm:$0xff]
        %v1231 = vld [vmem:[%s3 + $0x370] sm:$0xff]
        %v1232 = vld [vmem:[%s3 + $0x378] sm:$0xff]
        %v1233 = vld [vmem:[%s3 + $0x380] sm:$0xff]
        %v1234 = vld [vmem:[%s3 + $0x388] sm:$0xff]
        %v1235 = vld [vmem:[%s3 + $0x390] sm:$0xff]
        %v1236 = vld [vmem:[%s3 + $0x398] sm:$0xff]
        %v1237 = vld [vmem:[%s3 + $0x3a0] sm:$0xff]
        %v1238 = vld [vmem:[%s3 + $0x3a8] sm:$0xff]
        %v1239 = vld [vmem:[%s3 + $0x3b0] sm:$0xff]
        %v1240 = vld [vmem:[%s3 + $0x3b8] sm:$0xff]
        %v1241 = vld [vmem:[%s3 + $0x3c0] sm:$0xff]
        %v1242 = vld [vmem:[%s3 + $0x3c8] sm:$0xff]
        %v1243 = vld [vmem:[%s3 + $0x3d0] sm:$0xff]
        %v1244 = vld [vmem:[%s3 + $0x3d8] sm:$0xff]
        %v1245 = vld [vmem:[%s3 + $0x3e0] sm:$0xff]
        %v1246 = vld [vmem:[%s3 + $0x3e8] sm:$0xff]
        %v1247 = vld [vmem:[%s3 + $0x3f0] sm:$0xff]
        %v1248 = vld [vmem:[%s3 + $0x3f8] sm:$0xff]
        %v1249 = vld [vmem:[%s3 + $0x400] sm:$0xff]
        %v1250 = vld [vmem:[%s3 + $0x408] sm:$0xff]
        %v1251 = vld [vmem:[%s3 + $0x410] sm:$0xff]
        %v1252 = vld [vmem:[%s3 + $0x418] sm:$0xff]
        %v1253 = vld [vmem:[%s3 + $0x420] sm:$0xff]
        %v1254 = vld [vmem:[%s3 + $0x428] sm:$0xff]
        %v1255 = vld [vmem:[%s3 + $0x430] sm:$0xff]
        %v1256 = vld [vmem:[%s3 + $0x438] sm:$0xff]
        %v1257 = vld [vmem:[%s3 + $0x440] sm:$0xff]
        %v1258 = vld [vmem:[%s3 + $0x448] sm:$0xff]
        %v1259 = vld [vmem:[%s3 + $0x450] sm:$0xff]
        %v1260 = vld [vmem:[%s3 + $0x458] sm:$0xff]
        %v1261 = vld [vmem:[%s3 + $0x460] sm:$0xff]
        %v1262 = vld [vmem:[%s3 + $0x468] sm:$0xff]
        %v1263 = vld [vmem:[%s3 + $0x470] sm:$0xff]
        %v1264 = vld [vmem:[%s3 + $0x478] sm:$0xff]
        %v1265 = vld [vmem:[%s3 + $0x480] sm:$0xff]
        %v1266 = vld [vmem:[%s3 + $0x488] sm:$0xff]
        %v1267 = vld [vmem:[%s3 + $0x490] sm:$0xff]
        %v1268 = vld [vmem:[%s3 + $0x498] sm:$0xff]
        %v1269 = vld [vmem:[%s3 + $0x4a0] sm:$0xff]
        %v1270 = vld [vmem:[%s3 + $0x4a8] sm:$0xff]
        %v1271 = vld [vmem:[%s3 + $0x4b0] sm:$0xff]
        %v1272 = vld [vmem:[%s3 + $0x4b8] sm:$0xff]
        %v1273 = vld [vmem:[%s3 + $0x4c0] sm:$0xff]
        %v1274 = vld [vmem:[%s3 + $0x4c8] sm:$0xff]
        %v1275 = vld [vmem:[%s3 + $0x4d0] sm:$0xff]
        %v1276 = vld [vmem:[%s3 + $0x4d8] sm:$0xff]
        %v1277 = vld [vmem:[%s3 + $0x4e0] sm:$0xff]
        %v1278 = vld [vmem:[%s3 + $0x4e8] sm:$0xff]
        %v1279 = vld [vmem:[%s3 + $0x4f0] sm:$0xff]
        %v1280 = vld [vmem:[%s3 + $0x4f8] sm:$0xff]
        %v1281 = vld [vmem:[%s3 + $0x500] sm:$0xff]
        %v1282 = vld [vmem:[%s3 + $0x508] sm:$0xff]
        %v1283 = vld [vmem:[%s3 + $0x510] sm:$0xff]
        %v1284 = vld [vmem:[%s3 + $0x518] sm:$0xff]
        %v1285 = vld [vmem:[%s3 + $0x520] sm:$0xff]
        %v1286 = vld [vmem:[%s3 + $0x528] sm:$0xff]
        %v1287 = vld [vmem:[%s3 + $0x530] sm:$0xff]
        %v1288 = vld [vmem:[%s3 + $0x538] sm:$0xff]
        %v1289 = vld [vmem:[%s3 + $0x540] sm:$0xff]
        %v1290 = vld [vmem:[%s3 + $0x548] sm:$0xff]
        %v1291 = vld [vmem:[%s3 + $0x550] sm:$0xff]
        %v1292 = vld [vmem:[%s3 + $0x558] sm:$0xff]
        %v1293 = vld [vmem:[%s3 + $0x560] sm:$0xff]
        %v1294 = vld [vmem:[%s3 + $0x568] sm:$0xff]
        %v1295 = vld [vmem:[%s3 + $0x570] sm:$0xff]
        %v1296 = vld [vmem:[%s3 + $0x578] sm:$0xff]
        %v1297 = vld [vmem:[%s3 + $0x580] sm:$0xff]
        %v1298 = vld [vmem:[%s3 + $0x588] sm:$0xff]
        %v1299 = vld [vmem:[%s3 + $0x590] sm:$0xff]
        %v1300 = vld [vmem:[%s3 + $0x598] sm:$0xff]
        %v1301 = vld [vmem:[%s3 + $0x5a0] sm:$0xff]
        %v1302 = vld [vmem:[%s3 + $0x5a8] sm:$0xff]
        %v1303 = vld [vmem:[%s3 + $0x5b0] sm:$0xff]
        %v1304 = vld [vmem:[%s3 + $0x5b8] sm:$0xff]
        %v1305 = vld [vmem:[%s3 + $0x5c0] sm:$0xff]
        %v1306 = vld [vmem:[%s3 + $0x5c8] sm:$0xff]
        %v1307 = vld [vmem:[%s3 + $0x5d0] sm:$0xff]
        %v1308 = vld [vmem:[%s3 + $0x5d8] sm:$0xff]
        %v1309 = vld [vmem:[%s3 + $0x5e0] sm:$0xff]
        %v1310 = vld [vmem:[%s3 + $0x5e8] sm:$0xff]
        %v1311 = vld [vmem:[%s3 + $0x5f0] sm:$0xff]
        %v1312 = vld [vmem:[%s3 + $0x5f8] sm:$0xff]
        %v1313 = vld [vmem:[%s3 + $0x600] sm:$0xff]
        %v1314 = vld [vmem:[%s3 + $0x608] sm:$0xff]
        %v1315 = vld [vmem:[%s3 + $0x610] sm:$0xff]
        %v1316 = vld [vmem:[%s3 + $0x618] sm:$0xff]
        %v1317 = vld [vmem:[%s3 + $0x620] sm:$0xff]
        %v1318 = vld [vmem:[%s3 + $0x628] sm:$0xff]
        %v1319 = vld [vmem:[%s3 + $0x630] sm:$0xff]
        %v1320 = vld [vmem:[%s3 + $0x638] sm:$0xff]
        %v1321 = vld [vmem:[%s3 + $0x640] sm:$0xff]
        %v1322 = vld [vmem:[%s3 + $0x648] sm:$0xff]
        %v1323 = vld [vmem:[%s3 + $0x650] sm:$0xff]
        %v1324 = vld [vmem:[%s3 + $0x658] sm:$0xff]
        %v1325 = vld [vmem:[%s3 + $0x660] sm:$0xff]
        %v1326 = vld [vmem:[%s3 + $0x668] sm:$0xff]
        %v1327 = vld [vmem:[%s3 + $0x670] sm:$0xff]
        %v1328 = vld [vmem:[%s3 + $0x678] sm:$0xff]
        %v1329 = vld [vmem:[%s3 + $0x680] sm:$0xff]
        %v1330 = vld [vmem:[%s3 + $0x688] sm:$0xff]
        %v1331 = vld [vmem:[%s3 + $0x690] sm:$0xff]
        %v1332 = vld [vmem:[%s3 + $0x698] sm:$0xff]
        %v1333 = vld [vmem:[%s3 + $0x6a0] sm:$0xff]
        %v1334 = vld [vmem:[%s3 + $0x6a8] sm:$0xff]
        %v1335 = vld [vmem:[%s3 + $0x6b0] sm:$0xff]
        %v1336 = vld [vmem:[%s3 + $0x6b8] sm:$0xff]
        %v1337 = vld [vmem:[%s3 + $0x6c0] sm:$0xff]
        %v1338 = vld [vmem:[%s3 + $0x6c8] sm:$0xff]
        %v1339 = vld [vmem:[%s3 + $0x6d0] sm:$0xff]
        %v1340 = vld [vmem:[%s3 + $0x6d8] sm:$0xff]
        %v1341 = vld [vmem:[%s3 + $0x6e0] sm:$0xff]
        %v1342 = vld [vmem:[%s3 + $0x6e8] sm:$0xff]
        %v1343 = vld [vmem:[%s3 + $0x6f0] sm:$0xff]
        %v1344 = vld [vmem:[%s3 + $0x6f8] sm:$0xff]
        %v1345 = vld [vmem:[%s3 + $0x700] sm:$0xff]
        %v1346 = vld [vmem:[%s3 + $0x708] sm:$0xff]
        %v1347 = vld [vmem:[%s3 + $0x710] sm:$0xff]
        %v1348 = vld [vmem:[%s3 + $0x718] sm:$0xff]
        %v1349 = vld [vmem:[%s3 + $0x720] sm:$0xff]
        %v1350 = vld [vmem:[%s3 + $0x728] sm:$0xff]
        %v1351 = vld [vmem:[%s3 + $0x730] sm:$0xff]
        %v1352 = vld [vmem:[%s3 + $0x738] sm:$0xff]
        %v1353 = vld [vmem:[%s3 + $0x740] sm:$0xff]
        %v1354 = vld [vmem:[%s3 + $0x748] sm:$0xff]
        %v1355 = vld [vmem:[%s3 + $0x750] sm:$0xff]
        %v1356 = vld [vmem:[%s3 + $0x758] sm:$0xff]
        %v1357 = vld [vmem:[%s3 + $0x760] sm:$0xff]
        %v1358 = vld [vmem:[%s3 + $0x768] sm:$0xff]
        %v1359 = vld [vmem:[%s3 + $0x770] sm:$0xff]
        %v1360 = vld [vmem:[%s3 + $0x778] sm:$0xff]
        %v1361 = vld [vmem:[%s3 + $0x780] sm:$0xff]
        %v1362 = vld [vmem:[%s3 + $0x788] sm:$0xff]
        %v1363 = vld [vmem:[%s3 + $0x790] sm:$0xff]
        %v1364 = vld [vmem:[%s3 + $0x798] sm:$0xff]
        %v1365 = vld [vmem:[%s3 + $0x7a0] sm:$0xff]
        %v1366 = vld [vmem:[%s3 + $0x7a8] sm:$0xff]
        %v1367 = vld [vmem:[%s3 + $0x7b0] sm:$0xff]
        %v1368 = vld [vmem:[%s3 + $0x7b8] sm:$0xff]
        %v1369 = vld [vmem:[%s3 + $0x7c0] sm:$0xff]
        %v1370 = vld [vmem:[%s3 + $0x7c8] sm:$0xff]
        %v1371 = vld [vmem:[%s3 + $0x7d0] sm:$0xff]
        %v1372 = vld [vmem:[%s3 + $0x7d8] sm:$0xff]
        %v1373 = vld [vmem:[%s3 + $0x7e0] sm:$0xff]
        %v1374 = vld [vmem:[%s3 + $0x7e8] sm:$0xff]
        %v1375 = vld [vmem:[%s3 + $0x7f0] sm:$0xff]
        %v1376 = vld [vmem:[%s3 + $0x7f8] sm:$0xff]
        %v1377 = vld [vmem:[%s4] sm:$0x1]
        %v1379 = vlaneseq
        %v1380 = vshrl.u32 %v1379, 7
        %v1381 = vsub.s32 0, %v1380
        %v1382 = vrot.slane %v1377, %v1381
        %1384 = vmatprep.subr.mxu0 0.0
        %1385 = vmatpush1.msra.mxu0 %v1136
        %1386 = vmatprep.subr.mxu0 0.0
        %1387 = vmatpush1.msra.mxu0 %v1135
        %1388 = vmatprep.subr.mxu0 0.0
        %1389 = vmatpush1.msra.mxu0 %v1134
        %1390 = vmatprep.subr.mxu0 0.0
        %1391 = vmatpush1.msra.mxu0 %v1133
        %1392 = vmatprep.subr.mxu0 0.0
        %1393 = vmatpush1.msra.mxu0 %v1132
        %1394 = vmatprep.subr.mxu0 0.0
        %1395 = vmatpush1.msra.mxu0 %v1131
        %1396 = vmatprep.subr.mxu0 0.0
        %1397 = vmatpush1.msra.mxu0 %v1130
        %1398 = vmatprep.subr.mxu0 0.0
        %1399 = vmatpush1.msra.mxu0 %v1129
        %1400 = vmatprep.subr.mxu0 0.0
        %1401 = vmatpush1.msra.mxu0 %v1128
        %1402 = vmatprep.subr.mxu0 0.0
        %1403 = vmatpush1.msra.mxu0 %v1127
        %1404 = vmatprep.subr.mxu0 0.0
        %1405 = vmatpush1.msra.mxu0 %v1126
        %1406 = vmatprep.subr.mxu0 0.0
        %1407 = vmatpush1.msra.mxu0 %v1125
        %1408 = vmatprep.subr.mxu0 0.0
        %1409 = vmatpush1.msra.mxu0 %v1124
        %1410 = vmatprep.subr.mxu0 0.0
        %1411 = vmatpush1.msra.mxu0 %v1123
        %1412 = vmatprep.subr.mxu0 0.0
        %1413 = vmatpush1.msra.mxu0 %v1122
        %1414 = vmatprep.subr.mxu0 0.0
        %1415 = vmatpush1.msra.mxu0 %v1121
        %1416 = vmatprep.subr.mxu0 0.0
        %1417 = vmatpush2.msra.mxu0 %v1152
        %1418 = vmatprep.subr.mxu0 0.0
        %1419 = vmatpush2.msra.mxu0 %v1151
        %1420 = vmatprep.subr.mxu0 0.0
        %1421 = vmatpush2.msra.mxu0 %v1150
        %1422 = vmatprep.subr.mxu0 0.0
        %1423 = vmatpush2.msra.mxu0 %v1149
        %1424 = vmatprep.subr.mxu0 0.0
        %1425 = vmatpush2.msra.mxu0 %v1148
        %1426 = vmatprep.subr.mxu0 0.0
        %1427 = vmatpush2.msra.mxu0 %v1147
        %1428 = vmatprep.subr.mxu0 0.0
        %1429 = vmatpush2.msra.mxu0 %v1146
        %1430 = vmatprep.subr.mxu0 0.0
        %1431 = vmatpush2.msra.mxu0 %v1145
        %1432 = vmatprep.subr.mxu0 0.0
        %1433 = vmatpush2.msra.mxu0 %v1144
        %1434 = vmatprep.subr.mxu0 0.0
        %1435 = vmatpush2.msra.mxu0 %v1143
        %1436 = vmatprep.subr.mxu0 0.0
        %1437 = vmatpush2.msra.mxu0 %v1142
        %1438 = vmatprep.subr.mxu0 0.0
        %1439 = vmatpush2.msra.mxu0 %v1141
        %1440 = vmatprep.subr.mxu0 0.0
        %1441 = vmatpush2.msra.mxu0 %v1140
        %1442 = vmatprep.subr.mxu0 0.0
        %1443 = vmatpush2.msra.mxu0 %v1139
        %1444 = vmatprep.subr.mxu0 0.0
        %1445 = vmatpush2.msra.mxu0 %v1138
        %1446 = vmatprep.subr.mxu0 0.0
        %1447 = vmatpush2.msra.mxu0 %v1137
        %1448 = vmatprep.mubr.f32.mxu0 %v852
        %1449 = vmatmul.mubr.f32.gmra.mxu0 %v845
        %v1450 = vpop.f32.mrf.mxu0
        %v1451 = vadd.f32 %v1382, %v1450
        %v1452 = vpop.f32.mrf.mxu0
        %1453 = vdwg.mxu0
        %1454 = vmatprep.subr.mxu0 0.0
        %1455 = vmatpush1.msra.mxu0 %v1168
        %1456 = vmatprep.subr.mxu0 0.0
        %1457 = vmatpush1.msra.mxu0 %v1167
        %1458 = vmatprep.subr.mxu0 0.0
        %1459 = vmatpush1.msra.mxu0 %v1166
        %1460 = vmatprep.subr.mxu0 0.0
        %1461 = vmatpush1.msra.mxu0 %v1165
        %1462 = vmatprep.subr.mxu0 0.0
        %1463 = vmatpush1.msra.mxu0 %v1164
        %1464 = vmatprep.subr.mxu0 0.0
        %1465 = vmatpush1.msra.mxu0 %v1163
        %1466 = vmatprep.subr.mxu0 0.0
        %1467 = vmatpush1.msra.mxu0 %v1162
        %1468 = vmatprep.subr.mxu0 0.0
        %1469 = vmatpush1.msra.mxu0 %v1161
        %1470 = vmatprep.subr.mxu0 0.0
        %1471 = vmatpush1.msra.mxu0 %v1160
        %1472 = vmatprep.subr.mxu0 0.0
        %1473 = vmatpush1.msra.mxu0 %v1159
        %1474 = vmatprep.subr.mxu0 0.0
        %1475 = vmatpush1.msra.mxu0 %v1158
        %1476 = vmatprep.subr.mxu0 0.0
        %1477 = vmatpush1.msra.mxu0 %v1157
        %1478 = vmatprep.subr.mxu0 0.0
        %1479 = vmatpush1.msra.mxu0 %v1156
        %1480 = vmatprep.subr.mxu0 0.0
        %1481 = vmatpush1.msra.mxu0 %v1155
        %1482 = vmatprep.subr.mxu0 0.0
        %1483 = vmatpush1.msra.mxu0 %v1154
        %1484 = vmatprep.subr.mxu0 0.0
        %1485 = vmatpush1.msra.mxu0 %v1153
        %1486 = vmatprep.subr.mxu0 0.0
        %1487 = vmatpush2.msra.mxu0 %v1184
        %1488 = vmatprep.subr.mxu0 0.0
        %1489 = vmatpush2.msra.mxu0 %v1183
        %1490 = vmatprep.subr.mxu0 0.0
        %1491 = vmatpush2.msra.mxu0 %v1182
        %1492 = vmatprep.subr.mxu0 0.0
        %1493 = vmatpush2.msra.mxu0 %v1181
        %1494 = vmatprep.subr.mxu0 0.0
        %1495 = vmatpush2.msra.mxu0 %v1180
        %1496 = vmatprep.subr.mxu0 0.0
        %1497 = vmatpush2.msra.mxu0 %v1179
        %1498 = vmatprep.subr.mxu0 0.0
        %1499 = vmatpush2.msra.mxu0 %v1178
        %1500 = vmatprep.subr.mxu0 0.0
        %1501 = vmatpush2.msra.mxu0 %v1177
        %1502 = vmatprep.subr.mxu0 0.0
        %1503 = vmatpush2.msra.mxu0 %v1176
        %1504 = vmatprep.subr.mxu0 0.0
        %1505 = vmatpush2.msra.mxu0 %v1175
        %1506 = vmatprep.subr.mxu0 0.0
        %1507 = vmatpush2.msra.mxu0 %v1174
        %1508 = vmatprep.subr.mxu0 0.0
        %1509 = vmatpush2.msra.mxu0 %v1173
        %1510 = vmatprep.subr.mxu0 0.0
        %1511 = vmatpush2.msra.mxu0 %v1172
        %1512 = vmatprep.subr.mxu0 0.0
        %1513 = vmatpush2.msra.mxu0 %v1171
        %1514 = vmatprep.subr.mxu0 0.0
        %1515 = vmatpush2.msra.mxu0 %v1170
        %1516 = vmatprep.subr.mxu0 0.0
        %1517 = vmatpush2.msra.mxu0 %v1169
        %1518 = vmatprep.mubr.f32.mxu0 %v890
        %1519 = vmatmul.mubr.f32.gmra.mxu0 %v883
        %v1520 = vpop.f32.mrf.mxu0
        %v1521 = vadd.f32 %v1451, %v1520
        %v1522 = vpop.f32.mrf.mxu0
        %1523 = vdwg.mxu0
        %1524 = vmatprep.subr.mxu0 0.0
        %1525 = vmatpush1.msra.mxu0 %v1200
        %1526 = vmatprep.subr.mxu0 0.0
        %1527 = vmatpush1.msra.mxu0 %v1199
        %1528 = vmatprep.subr.mxu0 0.0
        %1529 = vmatpush1.msra.mxu0 %v1198
        %1530 = vmatprep.subr.mxu0 0.0
        %1531 = vmatpush1.msra.mxu0 %v1197
        %1532 = vmatprep.subr.mxu0 0.0
        %1533 = vmatpush1.msra.mxu0 %v1196
        %1534 = vmatprep.subr.mxu0 0.0
        %1535 = vmatpush1.msra.mxu0 %v1195
        %1536 = vmatprep.subr.mxu0 0.0
        %1537 = vmatpush1.msra.mxu0 %v1194
        %1538 = vmatprep.subr.mxu0 0.0
        %1539 = vmatpush1.msra.mxu0 %v1193
        %1540 = vmatprep.subr.mxu0 0.0
        %1541 = vmatpush1.msra.mxu0 %v1192
        %1542 = vmatprep.subr.mxu0 0.0
        %1543 = vmatpush1.msra.mxu0 %v1191
        %1544 = vmatprep.subr.mxu0 0.0
        %1545 = vmatpush1.msra.mxu0 %v1190
        %1546 = vmatprep.subr.mxu0 0.0
        %1547 = vmatpush1.msra.mxu0 %v1189
        %1548 = vmatprep.subr.mxu0 0.0
        %1549 = vmatpush1.msra.mxu0 %v1188
        %1550 = vmatprep.subr.mxu0 0.0
        %1551 = vmatpush1.msra.mxu0 %v1187
        %1552 = vmatprep.subr.mxu0 0.0
        %1553 = vmatpush1.msra.mxu0 %v1186
        %1554 = vmatprep.subr.mxu0 0.0
        %1555 = vmatpush1.msra.mxu0 %v1185
        %1556 = vmatprep.subr.mxu0 0.0
        %1557 = vmatpush2.msra.mxu0 %v1216
        %1558 = vmatprep.subr.mxu0 0.0
        %1559 = vmatpush2.msra.mxu0 %v1215
        %1560 = vmatprep.subr.mxu0 0.0
        %1561 = vmatpush2.msra.mxu0 %v1214
        %1562 = vmatprep.subr.mxu0 0.0
        %1563 = vmatpush2.msra.mxu0 %v1213
        %1564 = vmatprep.subr.mxu0 0.0
        %1565 = vmatpush2.msra.mxu0 %v1212
        %1566 = vmatprep.subr.mxu0 0.0
        %1567 = vmatpush2.msra.mxu0 %v1211
        %1568 = vmatprep.subr.mxu0 0.0
        %1569 = vmatpush2.msra.mxu0 %v1210
        %1570 = vmatprep.subr.mxu0 0.0
        %1571 = vmatpush2.msra.mxu0 %v1209
        %1572 = vmatprep.subr.mxu0 0.0
        %1573 = vmatpush2.msra.mxu0 %v1208
        %1574 = vmatprep.subr.mxu0 0.0
        %1575 = vmatpush2.msra.mxu0 %v1207
        %1576 = vmatprep.subr.mxu0 0.0
        %1577 = vmatpush2.msra.mxu0 %v1206
        %1578 = vmatprep.subr.mxu0 0.0
        %1579 = vmatpush2.msra.mxu0 %v1205
        %1580 = vmatprep.subr.mxu0 0.0
        %1581 = vmatpush2.msra.mxu0 %v1204
        %1582 = vmatprep.subr.mxu0 0.0
        %1583 = vmatpush2.msra.mxu0 %v1203
        %1584 = vmatprep.subr.mxu0 0.0
        %1585 = vmatpush2.msra.mxu0 %v1202
        %1586 = vmatprep.subr.mxu0 0.0
        %1587 = vmatpush2.msra.mxu0 %v1201
        %1588 = vmatprep.mubr.f32.mxu0 %v928
        %1589 = vmatmul.mubr.f32.gmra.mxu0 %v921
        %v1590 = vpop.f32.mrf.mxu0
        %v1591 = vadd.f32 %v1521, %v1590
        %v1592 = vpop.f32.mrf.mxu0
        %1593 = vdwg.mxu0
        %1594 = vmatprep.subr.mxu0 0.0
        %1595 = vmatpush1.msra.mxu0 %v1232
        %1596 = vmatprep.subr.mxu0 0.0
        %1597 = vmatpush1.msra.mxu0 %v1231
        %1598 = vmatprep.subr.mxu0 0.0
        %1599 = vmatpush1.msra.mxu0 %v1230
        %1600 = vmatprep.subr.mxu0 0.0
        %1601 = vmatpush1.msra.mxu0 %v1229
        %1602 = vmatprep.subr.mxu0 0.0
        %1603 = vmatpush1.msra.mxu0 %v1228
        %1604 = vmatprep.subr.mxu0 0.0
        %1605 = vmatpush1.msra.mxu0 %v1227
        %1606 = vmatprep.subr.mxu0 0.0
        %1607 = vmatpush1.msra.mxu0 %v1226
        %1608 = vmatprep.subr.mxu0 0.0
        %1609 = vmatpush1.msra.mxu0 %v1225
        %1610 = vmatprep.subr.mxu0 0.0
        %1611 = vmatpush1.msra.mxu0 %v1224
        %1612 = vmatprep.subr.mxu0 0.0
        %1613 = vmatpush1.msra.mxu0 %v1223
        %1614 = vmatprep.subr.mxu0 0.0
        %1615 = vmatpush1.msra.mxu0 %v1222
        %1616 = vmatprep.subr.mxu0 0.0
        %1617 = vmatpush1.msra.mxu0 %v1221
        %1618 = vmatprep.subr.mxu0 0.0
        %1619 = vmatpush1.msra.mxu0 %v1220
        %1620 = vmatprep.subr.mxu0 0.0
        %1621 = vmatpush1.msra.mxu0 %v1219
        %1622 = vmatprep.subr.mxu0 0.0
        %1623 = vmatpush1.msra.mxu0 %v1218
        %1624 = vmatprep.subr.mxu0 0.0
        %1625 = vmatpush1.msra.mxu0 %v1217
        %1626 = vmatprep.subr.mxu0 0.0
        %1627 = vmatpush2.msra.mxu0 %v1248
        %1628 = vmatprep.subr.mxu0 0.0
        %1629 = vmatpush2.msra.mxu0 %v1247
        %1630 = vmatprep.subr.mxu0 0.0
        %1631 = vmatpush2.msra.mxu0 %v1246
        %1632 = vmatprep.subr.mxu0 0.0
        %1633 = vmatpush2.msra.mxu0 %v1245
        %1634 = vmatprep.subr.mxu0 0.0
        %1635 = vmatpush2.msra.mxu0 %v1244
        %1636 = vmatprep.subr.mxu0 0.0
        %1637 = vmatpush2.msra.mxu0 %v1243
        %1638 = vmatprep.subr.mxu0 0.0
        %1639 = vmatpush2.msra.mxu0 %v1242
        %1640 = vmatprep.subr.mxu0 0.0
        %1641 = vmatpush2.msra.mxu0 %v1241
        %1642 = vmatprep.subr.mxu0 0.0
        %1643 = vmatpush2.msra.mxu0 %v1240
        %1644 = vmatprep.subr.mxu0 0.0
        %1645 = vmatpush2.msra.mxu0 %v1239
        %1646 = vmatprep.subr.mxu0 0.0
        %1647 = vmatpush2.msra.mxu0 %v1238
        %1648 = vmatprep.subr.mxu0 0.0
        %1649 = vmatpush2.msra.mxu0 %v1237
        %1650 = vmatprep.subr.mxu0 0.0
        %1651 = vmatpush2.msra.mxu0 %v1236
        %1652 = vmatprep.subr.mxu0 0.0
        %1653 = vmatpush2.msra.mxu0 %v1235
        %1654 = vmatprep.subr.mxu0 0.0
        %1655 = vmatpush2.msra.mxu0 %v1234
        %1656 = vmatprep.subr.mxu0 0.0
        %1657 = vmatpush2.msra.mxu0 %v1233
        %1658 = vmatprep.mubr.f32.mxu0 %v966
        %1659 = vmatmul.mubr.f32.gmra.mxu0 %v959
        %v1660 = vpop.f32.mrf.mxu0
        %v1661 = vadd.f32 %v1591, %v1660
        %v1662 = vpop.f32.mrf.mxu0
        %1663 = vdwg.mxu0
        %1664 = vmatprep.subr.mxu0 0.0
        %1665 = vmatpush1.msra.mxu0 %v1264
        %1666 = vmatprep.subr.mxu0 0.0
        %1667 = vmatpush1.msra.mxu0 %v1263
        %1668 = vmatprep.subr.mxu0 0.0
        %1669 = vmatpush1.msra.mxu0 %v1262
        %1670 = vmatprep.subr.mxu0 0.0
        %1671 = vmatpush1.msra.mxu0 %v1261
        %1672 = vmatprep.subr.mxu0 0.0
        %1673 = vmatpush1.msra.mxu0 %v1260
        %1674 = vmatprep.subr.mxu0 0.0
        %1675 = vmatpush1.msra.mxu0 %v1259
        %1676 = vmatprep.subr.mxu0 0.0
        %1677 = vmatpush1.msra.mxu0 %v1258
        %1678 = vmatprep.subr.mxu0 0.0
        %1679 = vmatpush1.msra.mxu0 %v1257
        %1680 = vmatprep.subr.mxu0 0.0
        %1681 = vmatpush1.msra.mxu0 %v1256
        %1682 = vmatprep.subr.mxu0 0.0
        %1683 = vmatpush1.msra.mxu0 %v1255
        %1684 = vmatprep.subr.mxu0 0.0
        %1685 = vmatpush1.msra.mxu0 %v1254
        %1686 = vmatprep.subr.mxu0 0.0
        %1687 = vmatpush1.msra.mxu0 %v1253
        %1688 = vmatprep.subr.mxu0 0.0
        %1689 = vmatpush1.msra.mxu0 %v1252
        %1690 = vmatprep.subr.mxu0 0.0
        %1691 = vmatpush1.msra.mxu0 %v1251
        %1692 = vmatprep.subr.mxu0 0.0
        %1693 = vmatpush1.msra.mxu0 %v1250
        %1694 = vmatprep.subr.mxu0 0.0
        %1695 = vmatpush1.msra.mxu0 %v1249
        %1696 = vmatprep.subr.mxu0 0.0
        %1697 = vmatpush2.msra.mxu0 %v1280
        %1698 = vmatprep.subr.mxu0 0.0
        %1699 = vmatpush2.msra.mxu0 %v1279
        %1700 = vmatprep.subr.mxu0 0.0
        %1701 = vmatpush2.msra.mxu0 %v1278
        %1702 = vmatprep.subr.mxu0 0.0
        %1703 = vmatpush2.msra.mxu0 %v1277
        %1704 = vmatprep.subr.mxu0 0.0
        %1705 = vmatpush2.msra.mxu0 %v1276
        %1706 = vmatprep.subr.mxu0 0.0
        %1707 = vmatpush2.msra.mxu0 %v1275
        %1708 = vmatprep.subr.mxu0 0.0
        %1709 = vmatpush2.msra.mxu0 %v1274
        %1710 = vmatprep.subr.mxu0 0.0
        %1711 = vmatpush2.msra.mxu0 %v1273
        %1712 = vmatprep.subr.mxu0 0.0
        %1713 = vmatpush2.msra.mxu0 %v1272
        %1714 = vmatprep.subr.mxu0 0.0
        %1715 = vmatpush2.msra.mxu0 %v1271
        %1716 = vmatprep.subr.mxu0 0.0
        %1717 = vmatpush2.msra.mxu0 %v1270
        %1718 = vmatprep.subr.mxu0 0.0
        %1719 = vmatpush2.msra.mxu0 %v1269
        %1720 = vmatprep.subr.mxu0 0.0
        %1721 = vmatpush2.msra.mxu0 %v1268
        %1722 = vmatprep.subr.mxu0 0.0
        %1723 = vmatpush2.msra.mxu0 %v1267
        %1724 = vmatprep.subr.mxu0 0.0
        %1725 = vmatpush2.msra.mxu0 %v1266
        %1726 = vmatprep.subr.mxu0 0.0
        %1727 = vmatpush2.msra.mxu0 %v1265
        %1728 = vmatprep.mubr.f32.mxu0 %v1004
        %1729 = vmatmul.mubr.f32.gmra.mxu0 %v997
        %v1730 = vpop.f32.mrf.mxu0
        %v1731 = vadd.f32 %v1661, %v1730
        %v1732 = vpop.f32.mrf.mxu0
        %1733 = vdwg.mxu0
        %1734 = vmatprep.subr.mxu0 0.0
        %1735 = vmatpush1.msra.mxu0 %v1296
        %1736 = vmatprep.subr.mxu0 0.0
        %1737 = vmatpush1.msra.mxu0 %v1295
        %1738 = vmatprep.subr.mxu0 0.0
        %1739 = vmatpush1.msra.mxu0 %v1294
        %1740 = vmatprep.subr.mxu0 0.0
        %1741 = vmatpush1.msra.mxu0 %v1293
        %1742 = vmatprep.subr.mxu0 0.0
        %1743 = vmatpush1.msra.mxu0 %v1292
        %1744 = vmatprep.subr.mxu0 0.0
        %1745 = vmatpush1.msra.mxu0 %v1291
        %1746 = vmatprep.subr.mxu0 0.0
        %1747 = vmatpush1.msra.mxu0 %v1290
        %1748 = vmatprep.subr.mxu0 0.0
        %1749 = vmatpush1.msra.mxu0 %v1289
        %1750 = vmatprep.subr.mxu0 0.0
        %1751 = vmatpush1.msra.mxu0 %v1288
        %1752 = vmatprep.subr.mxu0 0.0
        %1753 = vmatpush1.msra.mxu0 %v1287
        %1754 = vmatprep.subr.mxu0 0.0
        %1755 = vmatpush1.msra.mxu0 %v1286
        %1756 = vmatprep.subr.mxu0 0.0
        %1757 = vmatpush1.msra.mxu0 %v1285
        %1758 = vmatprep.subr.mxu0 0.0
        %1759 = vmatpush1.msra.mxu0 %v1284
        %1760 = vmatprep.subr.mxu0 0.0
        %1761 = vmatpush1.msra.mxu0 %v1283
        %1762 = vmatprep.subr.mxu0 0.0
        %1763 = vmatpush1.msra.mxu0 %v1282
        %1764 = vmatprep.subr.mxu0 0.0
        %1765 = vmatpush1.msra.mxu0 %v1281
        %1766 = vmatprep.subr.mxu0 0.0
        %1767 = vmatpush2.msra.mxu0 %v1312
        %1768 = vmatprep.subr.mxu0 0.0
        %1769 = vmatpush2.msra.mxu0 %v1311
        %1770 = vmatprep.subr.mxu0 0.0
        %1771 = vmatpush2.msra.mxu0 %v1310
        %1772 = vmatprep.subr.mxu0 0.0
        %1773 = vmatpush2.msra.mxu0 %v1309
        %1774 = vmatprep.subr.mxu0 0.0
        %1775 = vmatpush2.msra.mxu0 %v1308
        %1776 = vmatprep.subr.mxu0 0.0
        %1777 = vmatpush2.msra.mxu0 %v1307
        %1778 = vmatprep.subr.mxu0 0.0
        %1779 = vmatpush2.msra.mxu0 %v1306
        %1780 = vmatprep.subr.mxu0 0.0
        %1781 = vmatpush2.msra.mxu0 %v1305
        %1782 = vmatprep.subr.mxu0 0.0
        %1783 = vmatpush2.msra.mxu0 %v1304
        %1784 = vmatprep.subr.mxu0 0.0
        %1785 = vmatpush2.msra.mxu0 %v1303
        %1786 = vmatprep.subr.mxu0 0.0
        %1787 = vmatpush2.msra.mxu0 %v1302
        %1788 = vmatprep.subr.mxu0 0.0
        %1789 = vmatpush2.msra.mxu0 %v1301
        %1790 = vmatprep.subr.mxu0 0.0
        %1791 = vmatpush2.msra.mxu0 %v1300
        %1792 = vmatprep.subr.mxu0 0.0
        %1793 = vmatpush2.msra.mxu0 %v1299
        %1794 = vmatprep.subr.mxu0 0.0
        %1795 = vmatpush2.msra.mxu0 %v1298
        %1796 = vmatprep.subr.mxu0 0.0
        %1797 = vmatpush2.msra.mxu0 %v1297
        %1798 = vmatprep.mubr.f32.mxu0 %v1042
        %1799 = vmatmul.mubr.f32.gmra.mxu0 %v1035
        %v1800 = vpop.f32.mrf.mxu0
        %v1801 = vadd.f32 %v1731, %v1800
        %v1802 = vpop.f32.mrf.mxu0
        %1803 = vdwg.mxu0
        %1804 = vmatprep.subr.mxu0 0.0
        %1805 = vmatpush1.msra.mxu0 %v1328
        %1806 = vmatprep.subr.mxu0 0.0
        %1807 = vmatpush1.msra.mxu0 %v1327
        %1808 = vmatprep.subr.mxu0 0.0
        %1809 = vmatpush1.msra.mxu0 %v1326
        %1810 = vmatprep.subr.mxu0 0.0
        %1811 = vmatpush1.msra.mxu0 %v1325
        %1812 = vmatprep.subr.mxu0 0.0
        %1813 = vmatpush1.msra.mxu0 %v1324
        %1814 = vmatprep.subr.mxu0 0.0
        %1815 = vmatpush1.msra.mxu0 %v1323
        %1816 = vmatprep.subr.mxu0 0.0
        %1817 = vmatpush1.msra.mxu0 %v1322
        %1818 = vmatprep.subr.mxu0 0.0
        %1819 = vmatpush1.msra.mxu0 %v1321
        %1820 = vmatprep.subr.mxu0 0.0
        %1821 = vmatpush1.msra.mxu0 %v1320
        %1822 = vmatprep.subr.mxu0 0.0
        %1823 = vmatpush1.msra.mxu0 %v1319
        %1824 = vmatprep.subr.mxu0 0.0
        %1825 = vmatpush1.msra.mxu0 %v1318
        %1826 = vmatprep.subr.mxu0 0.0
        %1827 = vmatpush1.msra.mxu0 %v1317
        %1828 = vmatprep.subr.mxu0 0.0
        %1829 = vmatpush1.msra.mxu0 %v1316
        %1830 = vmatprep.subr.mxu0 0.0
        %1831 = vmatpush1.msra.mxu0 %v1315
        %1832 = vmatprep.subr.mxu0 0.0
        %1833 = vmatpush1.msra.mxu0 %v1314
        %1834 = vmatprep.subr.mxu0 0.0
        %1835 = vmatpush1.msra.mxu0 %v1313
        %1836 = vmatprep.subr.mxu0 0.0
        %1837 = vmatpush2.msra.mxu0 %v1344
        %1838 = vmatprep.subr.mxu0 0.0
        %1839 = vmatpush2.msra.mxu0 %v1343
        %1840 = vmatprep.subr.mxu0 0.0
        %1841 = vmatpush2.msra.mxu0 %v1342
        %1842 = vmatprep.subr.mxu0 0.0
        %1843 = vmatpush2.msra.mxu0 %v1341
        %1844 = vmatprep.subr.mxu0 0.0
        %1845 = vmatpush2.msra.mxu0 %v1340
        %1846 = vmatprep.subr.mxu0 0.0
        %1847 = vmatpush2.msra.mxu0 %v1339
        %1848 = vmatprep.subr.mxu0 0.0
        %1849 = vmatpush2.msra.mxu0 %v1338
        %1850 = vmatprep.subr.mxu0 0.0
        %1851 = vmatpush2.msra.mxu0 %v1337
        %1852 = vmatprep.subr.mxu0 0.0
        %1853 = vmatpush2.msra.mxu0 %v1336
        %1854 = vmatprep.subr.mxu0 0.0
        %1855 = vmatpush2.msra.mxu0 %v1335
        %1856 = vmatprep.subr.mxu0 0.0
        %1857 = vmatpush2.msra.mxu0 %v1334
        %1858 = vmatprep.subr.mxu0 0.0
        %1859 = vmatpush2.msra.mxu0 %v1333
        %1860 = vmatprep.subr.mxu0 0.0
        %1861 = vmatpush2.msra.mxu0 %v1332
        %1862 = vmatprep.subr.mxu0 0.0
        %1863 = vmatpush2.msra.mxu0 %v1331
        %1864 = vmatprep.subr.mxu0 0.0
        %1865 = vmatpush2.msra.mxu0 %v1330
        %1866 = vmatprep.subr.mxu0 0.0
        %1867 = vmatpush2.msra.mxu0 %v1329
        %1868 = vmatprep.mubr.f32.mxu0 %v1080
        %1869 = vmatmul.mubr.f32.gmra.mxu0 %v1073
        %v1870 = vpop.f32.mrf.mxu0
        %v1871 = vadd.f32 %v1801, %v1870
        %v1872 = vpop.f32.mrf.mxu0
        %1873 = vdwg.mxu0
        %1874 = vmatprep.subr.mxu0 0.0
        %1875 = vmatpush1.msra.mxu0 %v1360
        %1876 = vmatprep.subr.mxu0 0.0
        %1877 = vmatpush1.msra.mxu0 %v1359
        %1878 = vmatprep.subr.mxu0 0.0
        %1879 = vmatpush1.msra.mxu0 %v1358
        %1880 = vmatprep.subr.mxu0 0.0
        %1881 = vmatpush1.msra.mxu0 %v1357
        %1882 = vmatprep.subr.mxu0 0.0
        %1883 = vmatpush1.msra.mxu0 %v1356
        %1884 = vmatprep.subr.mxu0 0.0
        %1885 = vmatpush1.msra.mxu0 %v1355
        %1886 = vmatprep.subr.mxu0 0.0
        %1887 = vmatpush1.msra.mxu0 %v1354
        %1888 = vmatprep.subr.mxu0 0.0
        %1889 = vmatpush1.msra.mxu0 %v1353
        %1890 = vmatprep.subr.mxu0 0.0
        %1891 = vmatpush1.msra.mxu0 %v1352
        %1892 = vmatprep.subr.mxu0 0.0
        %1893 = vmatpush1.msra.mxu0 %v1351
        %1894 = vmatprep.subr.mxu0 0.0
        %1895 = vmatpush1.msra.mxu0 %v1350
        %1896 = vmatprep.subr.mxu0 0.0
        %1897 = vmatpush1.msra.mxu0 %v1349
        %1898 = vmatprep.subr.mxu0 0.0
        %1899 = vmatpush1.msra.mxu0 %v1348
        %1900 = vmatprep.subr.mxu0 0.0
        %1901 = vmatpush1.msra.mxu0 %v1347
        %1902 = vmatprep.subr.mxu0 0.0
        %1903 = vmatpush1.msra.mxu0 %v1346
        %1904 = vmatprep.subr.mxu0 0.0
        %1905 = vmatpush1.msra.mxu0 %v1345
        %1906 = vmatprep.subr.mxu0 0.0
        %1907 = vmatpush2.msra.mxu0 %v1376
        %1908 = vmatprep.subr.mxu0 0.0
        %1909 = vmatpush2.msra.mxu0 %v1375
        %1910 = vmatprep.subr.mxu0 0.0
        %1911 = vmatpush2.msra.mxu0 %v1374
        %1912 = vmatprep.subr.mxu0 0.0
        %1913 = vmatpush2.msra.mxu0 %v1373
        %1914 = vmatprep.subr.mxu0 0.0
        %1915 = vmatpush2.msra.mxu0 %v1372
        %1916 = vmatprep.subr.mxu0 0.0
        %1917 = vmatpush2.msra.mxu0 %v1371
        %1918 = vmatprep.subr.mxu0 0.0
        %1919 = vmatpush2.msra.mxu0 %v1370
        %1920 = vmatprep.subr.mxu0 0.0
        %1921 = vmatpush2.msra.mxu0 %v1369
        %1922 = vmatprep.subr.mxu0 0.0
        %1923 = vmatpush2.msra.mxu0 %v1368
        %1924 = vmatprep.subr.mxu0 0.0
        %1925 = vmatpush2.msra.mxu0 %v1367
        %1926 = vmatprep.subr.mxu0 0.0
        %1927 = vmatpush2.msra.mxu0 %v1366
        %1928 = vmatprep.subr.mxu0 0.0
        %1929 = vmatpush2.msra.mxu0 %v1365
        %1930 = vmatprep.subr.mxu0 0.0
        %1931 = vmatpush2.msra.mxu0 %v1364
        %1932 = vmatprep.subr.mxu0 0.0
        %1933 = vmatpush2.msra.mxu0 %v1363
        %1934 = vmatprep.subr.mxu0 0.0
        %1935 = vmatpush2.msra.mxu0 %v1362
        %1936 = vmatprep.subr.mxu0 0.0
        %1937 = vmatpush2.msra.mxu0 %v1361
        %1938 = vmatprep.mubr.f32.mxu0 %v1118
        %1939 = vmatmul.mubr.f32.gmra.mxu0 %v1111
        %v1940 = vpop.f32.mrf.mxu0
        %v1941 = vadd.f32 %v1871, %v1940
        %v1942 = vpop.f32.mrf.mxu0
        %1943 = vdwg.mxu0
        %v1944 = vmax.f32 %v1941, 0.0
        %v1945 = vld [vmem:[%s5] sm:$0xff]
        %v1946 = vld [vmem:[%s5 + $0x8] sm:$0xff]
        %v1947 = vld [vmem:[%s5 + $0x10] sm:$0xff]
        %v1948 = vld [vmem:[%s5 + $0x18] sm:$0xff]
        %v1949 = vld [vmem:[%s6] sm:$0x1]
        %v1951 = vlaneseq
        %v1952 = vshrl.u32 %v1951, 7
        %v1953 = vsub.s32 0, %v1952
        %v1954 = vrot.slane %v1949, %v1953
        %vm1956 = vcmask 261120
        %v1958 = vsel %vm1956, %v1944, 0
        %1960 = vmatprep.subr.mxu0 0.0
        %1961 = vmatpush1.msra.mxu0 0.0
        %1962 = vmatprep.subr.mxu0 0.0
        %1963 = vmatpush1.msra.mxu0 0.0
        %1964 = vmatprep.subr.mxu0 0.0
        %1965 = vmatpush1.msra.mxu0 0.0
        %1966 = vmatprep.subr.mxu0 0.0
        %1967 = vmatpush1.msra.mxu0 0.0
        %1968 = vmatprep.subr.mxu0 0.0
        %1969 = vmatpush1.msra.mxu0 0.0
        %1970 = vmatprep.subr.mxu0 0.0
        %1971 = vmatpush1.msra.mxu0 0.0
        %1972 = vmatprep.subr.mxu0 0.0
        %1973 = vmatpush1.msra.mxu0 0.0
        %1974 = vmatprep.subr.mxu0 0.0
        %1975 = vmatpush1.msra.mxu0 0.0
        %1976 = vmatprep.subr.mxu0 0.0
        %1977 = vmatpush1.msra.mxu0 0.0
        %1978 = vmatprep.subr.mxu0 0.0
        %1979 = vmatpush1.msra.mxu0 0.0
        %1980 = vmatprep.subr.mxu0 0.0
        %1981 = vmatpush1.msra.mxu0 0.0
        %1982 = vmatprep.subr.mxu0 0.0
        %1983 = vmatpush1.msra.mxu0 0.0
        %1984 = vmatprep.subr.mxu0 0.0
        %1985 = vmatpush1.msra.mxu0 %v1948
        %1986 = vmatprep.subr.mxu0 0.0
        %1987 = vmatpush1.msra.mxu0 %v1947
        %1988 = vmatprep.subr.mxu0 0.0
        %1989 = vmatpush1.msra.mxu0 %v1946
        %1990 = vmatprep.subr.mxu0 0.0
        %1991 = vmatpush1.msra.mxu0 %v1945
        %1992 = vmatprep.subr.mxu0 0.0
        %1993 = vmatpush2.msra.mxu0 0.0
        %1994 = vmatprep.subr.mxu0 0.0
        %1995 = vmatpush2.msra.mxu0 0.0
        %1996 = vmatprep.subr.mxu0 0.0
        %1997 = vmatpush2.msra.mxu0 0.0
        %1998 = vmatprep.subr.mxu0 0.0
        %1999 = vmatpush2.msra.mxu0 0.0
        %2000 = vmatprep.subr.mxu0 0.0
        %2001 = vmatpush2.msra.mxu0 0.0
        %2002 = vmatprep.subr.mxu0 0.0
        %2003 = vmatpush2.msra.mxu0 0.0
        %2004 = vmatprep.subr.mxu0 0.0
        %2005 = vmatpush2.msra.mxu0 0.0
        %2006 = vmatprep.subr.mxu0 0.0
        %2007 = vmatpush2.msra.mxu0 0.0
        %2008 = vmatprep.subr.mxu0 0.0
        %2009 = vmatpush2.msra.mxu0 0.0
        %2010 = vmatprep.subr.mxu0 0.0
        %2011 = vmatpush2.msra.mxu0 0.0
        %2012 = vmatprep.subr.mxu0 0.0
        %2013 = vmatpush2.msra.mxu0 0.0
        %2014 = vmatprep.subr.mxu0 0.0
        %2015 = vmatpush2.msra.mxu0 0.0
        %2016 = vmatprep.subr.mxu0 0.0
        %2017 = vmatpush2.msra.mxu0 0.0
        %2018 = vmatprep.subr.mxu0 0.0
        %2019 = vmatpush2.msra.mxu0 0.0
        %2020 = vmatprep.subr.mxu0 0.0
        %2021 = vmatpush2.msra.mxu0 0.0
        %2022 = vmatprep.subr.mxu0 0.0
        %2023 = vmatpush2.msra.mxu0 0.0
        %2024 = vmatprep.mubr.f32.mxu0 0.0
        %2025 = vmatmul.mubr.f32.gmra.mxu0 %v1958
        %v2026 = vpop.f32.mrf.mxu0
        %v2027 = vadd.f32 %v1954, %v2026
        %v2028 = vpop.f32.mrf.mxu0
        %2029 = vdwg.mxu0
        %vm2030 = vcmask 44032
        %v2031 = vsel %vm2030, %v2027, -inf
        %2032 = vmax.xlane.f32.xlu0 %v2031
        %v2033 = vpop.xlane.xlu0 %2032
        %v2034 = vsub.f32 %v2027, %v2033
        %v2035 = vmul.f32 %v2034, 1.442695
        %v2036 = vpow.pop %v2035
        %v2037 = vsel %vm2030, %v2036, 0.0
        %2038 = vadd.xlane.f32.xlu0 %v2037
        %v2039 = vpop.xlane.xlu0 %2038
        %v2040 = vlog2.pop %v2039
        %v2041 = vmul.f32 %v2040, 0.6931472
        %v2042 = vsub.f32 %v2034, %v2041
        %2043 = vst.msk [vmem:[%s274] sm:$0xf] %vm2030, %v2042
        %s2044 = sand.u32 %s181, 1
        %s2045 = scalar_lea.sflag [#allocation4], %s2044
        %s2046 = sand.u32 %s181, 1
        %s2047 = smul.addr %s2046, 4
        %s2048 = scalar_lea.vmem [#allocation3], %s2047
        // Predicated region
        $region49: #{multiplicative_actor_forward.1} parent=47 // pred_check
          %p2049 = pneg %p191
        $region50: #{multiplicative_actor_forward.1} parent=47 // pred_check_branch
          %2051 = sbr.rel (%p2049) target = $region52
        $region51: #{multiplicative_actor_forward.1} parent=47 // pred_region
          %s2053 = ssub.s32 64, 64
          %2054 = vsyncadd %s2045, %s2053
          %s2055 = smul.addr %s21, 64
          %s2056 = scalar_lea.hbm %s7, %s2055
          %s2058 = sshll.u32 %s2048, 4
          %s2059 = int_to_ptr.vmem [resolvable:$true] %s2058
          %2061 = dma.vmem_to_hbm [thread:$0]  %s2059, 64, %s2056, %s2045
        $region52: #{multiplicative_actor_forward.1} parent=47 // pred_fallthru
          _
      $region48: #{multiplicative_actor_forward.1} parent=5 // pred_fallthru
        _
      %p2062 = scmp.le.s32.totalorder 2, %s16
      // Predicated region
      $region53: #{multiplicative_actor_forward.1} parent=5 // pred_check
        %p2063 = pneg %p2062
      $region54: #{multiplicative_actor_forward.1} parent=5 // pred_check_branch
        %2065 = sbr.rel (%p2063) target = $region56
      $region55: #{multiplicative_actor_forward.1} parent=5 // pred_region
        %s2066 = ssub.s32 %s16, 2
        // Predicated region
        $region57: #{multiplicative_actor_forward.1} parent=55 // pred_check
          %p2067 = pneg %p197
        $region58: #{multiplicative_actor_forward.1} parent=55 // pred_check_branch
          %2069 = sbr.rel (%p2067) target = $region60
        $region59: #{multiplicative_actor_forward.1} parent=55 // pred_region
          %s2070 = sand.u32 %s182, 1
          %s2071 = scalar_lea.sflag [#allocation4], %s2070
          %s2072 = sand.u32 %s182, 1
          %s2073 = smul.addr %s2072, 4
          %s2074 = scalar_lea.vmem [#allocation3], %s2073
          %2075 = dma.done %s2071, 64
        $region60: #{multiplicative_actor_forward.1} parent=55 // pred_fallthru
          _
      $region56: #{multiplicative_actor_forward.1} parent=5 // pred_fallthru
        _
    $region6: #{multiplicative_actor_forward.1} parent=1 // loop_footer
      %s20 = sadd.s32 1, %s16
    $region7: #{multiplicative_actor_forward.1} parent=1 // loop_footer_branch
      %15 = sbr.rel target = $region3
    $region8: #{multiplicative_actor_forward.1} parent=1 // loop_exit
      _
    %2076 = vsyncpa [#allocation4], 1
    %s2077 = scalar_lea.sflag [#allocation4], 1
    %2078 = vsyncpa %s2077, 1

</llo_original>
